<compile_context>
chip_gen: v7x
topology: tpu7x:2x2x1
jax: 0.10.0
libtpu: 0.0.40
codegen_flags: <defaults>
</compile_context>

<pallas_src>
import jax
import jax.numpy as jnp
from jax.experimental import pallas as pl
from jax.experimental.pallas import tpu as pltpu

EPS = 1e-5


def _basic_block_kernel(x_ref, b1_ref, b2_ref, g1_ref, be1_ref, g2_ref, be2_ref,
                        out_ref, pad1_ref, pad2_ref):
    # x_ref    : [N, H, W*C]          f32   input, channels fused into lanes
    # b1_ref   : [3, (W+2)*C, W*C]    bf16  conv1 banded weights (one per ky)
    # b2_ref   : [3, (W+2)*C, W*C]    bf16  conv2 banded weights
    # g*/be*   : [1, C]               f32   BN gamma / beta
    # out_ref  : [N, H, W*C]          f32
    # pad*_ref : [N, H+2, (W+2)*C]    f32   zero-padded scratch
    N, H, WC = x_ref.shape
    C = g1_ref.shape[-1]
    W = WC // C
    PWC = (W + 2) * C
    rows = N * H
    inv_cnt = 1.0 / float(N * H * W)

    def fill_padded(pad_ref, interior):
        # Halo-only zeroing: top/bottom rows and left/right C-wide columns.
        zrow = jnp.zeros((N, 1, PWC), jnp.float32)
        zcol = jnp.zeros((N, H + 2, C), jnp.float32)
        pad_ref[:, 0:1, :] = zrow
        pad_ref[:, H + 1:H + 2, :] = zrow
        pad_ref[:, :, 0:C] = zcol
        pad_ref[:, :, PWC - C:PWC] = zcol
        pad_ref[:, 1:H + 1, C:PWC - C] = interior

    def conv3x3(pad_ref, b_ref):
        # 3 MXU matmuls per conv (kx taps folded into the banded weight).
        # bf16 operands, f32 accumulation.  Each row-window operand is
        # consumed immediately by its dot, so no patch temporaries are ever
        # simultaneously live (and none of them require a relayout copy).
        acc = jnp.zeros((rows, WC), jnp.float32)
        for ky in range(3):
            m = pad_ref[:, ky:ky + H, :].reshape(rows, PWC)
            acc = acc + jnp.dot(m.astype(jnp.bfloat16), b_ref[ky],
                                preferred_element_type=jnp.float32)
        return acc

    def lane_channel_sum(v):
        # [1, W*C] -> [1, C]: fold the W lane-blocks onto the channel block.
        tot = v[:, 0:C]
        for w in range(1, W):
            tot = tot + v[:, w * C:(w + 1) * C]
        return tot

    def batchnorm(acc, g_ref, be_ref):
        # Fused one-pass batch statistics: sum(x) and sum(x^2) from a single
        # pass over [acc | acc*acc]; variance as E[x^2]-E[x]^2, all in f32.
        # (For large `rows` this row reduction can be pushed onto the MXU with
        # a ones-row matmul; kept on the vector units here to keep the stats
        # exactly f32.)
        cat = jnp.concatenate([acc, acc * acc], axis=1)        # [rows, 2*WC]
        sums = jnp.sum(cat, axis=0, keepdims=True)             # [1, 2*WC]
        mean = lane_channel_sum(sums[:, 0:WC]) * inv_cnt       # [1, C]
        var = lane_channel_sum(sums[:, WC:2 * WC]) * inv_cnt - mean * mean
        scale = g_ref[...] * jax.lax.rsqrt(var + EPS)          # [1, C]
        shift = be_ref[...] - mean * scale
        scale_w = jnp.concatenate([scale] * W, axis=1)         # [1, W*C]
        shift_w = jnp.concatenate([shift] * W, axis=1)
        return acc * scale_w + shift_w                         # lane-dense VPU

    # ---- conv1 -> bn1 -> relu ---------------------------------------------
    fill_padded(pad1_ref, x_ref[...])
    h = jnp.maximum(batchnorm(conv3x3(pad1_ref, b1_ref), g1_ref, be1_ref), 0.0)

    # ---- conv2 -> bn2 -> + identity -> relu -------------------------------
    fill_padded(pad2_ref, h.reshape(N, H, WC))
    h2 = batchnorm(conv3x3(pad2_ref, b2_ref), g2_ref, be2_ref)
    y = jnp.maximum(h2 + x_ref[...].reshape(rows, WC), 0.0)
    out_ref[...] = y.reshape(N, H, WC)                         # lane-dense store


def _banded_weights(w_oihw, W):
    """OIHW conv weights -> per-ky banded matmul operands.

    Returns B with shape [3, (W+2)*Cin, W*Cout] where
      B[ky, u*Cin + ci, w*Cout + co] = w[co, ci, ky, u - w]   if 0 <= u-w <= 2
                                       0                      otherwise,
    so one matmul of the ky-shifted padded row window [N*H, (W+2)*Cin] against
    B[ky] evaluates all three kx taps of that kernel row for every output
    pixel, keeping both matmul operands and the accumulator lane-dense.
    """
    w_hwio = jnp.transpose(w_oihw, (2, 3, 1, 0))               # [3, 3, Cin, Cout]
    KH, KW, Cin, Cout = w_hwio.shape
    eye = jnp.eye(W, dtype=w_hwio.dtype)
    bands = []
    for ky in range(KH):
        B = jnp.zeros(((W + 2) * Cin, W * Cout), w_hwio.dtype)
        for kx in range(KW):
            shift = jnp.zeros((W + 2, W), w_hwio.dtype).at[kx:kx + W, :].set(eye)
            B = B + jnp.kron(shift, w_hwio[ky, kx])
        bands.append(B)
    return jnp.stack(bands)


def basic_block(x_nhwc, w1_oihw, w2_oihw, g1, b1, g2, b2):
    """BasicBlock forward (stride=1, no downsample), training-mode BatchNorm."""
    N, H, W, C = x_nhwc.shape
    assert w1_oihw.shape[0] == C and w2_oihw.shape[:2] == (C, C)

    x2d = x_nhwc.reshape(N, H, W * C)                          # lane-dense layout
    b1_band = _banded_weights(w1_oihw, W).astype(jnp.bfloat16)  # bf16 MXU operands
    b2_band = _banded_weights(w2_oihw, W).astype(jnp.bfloat16)

    vmem = pl.BlockSpec(memory_space=pltpu.MemorySpace.VMEM)
    scratch = [pltpu.VMEM((N, H + 2, (W + 2) * C), jnp.float32),
               pltpu.VMEM((N, H + 2, (W + 2) * C), jnp.float32)]

    # VMEM budget from the actual footprint (with generous headroom).
    scratch_bytes = 2 * N * (H + 2) * (W + 2) * C * 4
    io_bytes = (x2d.size * 4 * 2 + b1_band.size * 2 + b2_band.size * 2 + 4 * 4 * C)
    vmem_limit = int(min(max(8 * (io_bytes + scratch_bytes), 16 << 20), 64 << 20))

    # TODO(synk): at real ResNet shapes (e.g. 8x56x56x64) this needs a grid
    # over N / H-tiles (1-row halo via index_map), a two-pass BatchNorm so the
    # batch statistics stay global across tiles, bf16 padded scratch, and
    # dimension_semantics=("parallel", ...) so v7x can use both TensorCores;
    # at this toy shape a single VMEM-resident block is optimal.
    out = pl.pallas_call(
        _basic_block_kernel,
        out_shape=jax.ShapeDtypeStruct((N, H, W * C), jnp.float32),
        in_specs=[vmem] * 7,
        out_specs=vmem,
        scratch_shapes=scratch,
        compiler_params=pltpu.CompilerParams(vmem_limit_bytes=vmem_limit),
    )(x2d, b1_band, b2_band,
      g1.reshape(1, -1), b1.reshape(1, -1), g2.reshape(1, -1), b2.reshape(1, -1))
    return out.reshape(N, H, W, C)


# ---------------------------- pure-JAX references ----------------------------
def _reference(x_nhwc, w1_oihw, w2_oihw, g1, b1, g2, b2, *, bf16_matmul):
    """BasicBlock forward in plain JAX (training-mode BN, batch statistics)."""
    def conv(x, w_oihw):
        w = jnp.transpose(w_oihw, (2, 3, 1, 0))                # OIHW -> HWIO
        if bf16_matmul:                                        # match kernel rounding
            x, w, prec = x.astype(jnp.bfloat16), w.astype(jnp.bfloat16), None
        else:
            prec = jax.lax.Precision.HIGHEST
        return jax.lax.conv_general_dilated(
            x, w, window_strides=(1, 1), padding=((1, 1), (1, 1)),
            dimension_numbers=("NHWC", "HWIO", "NHWC"),
            preferred_element_type=jnp.float32, precision=prec)

    def bn(x, g, b):
        m = jnp.mean(x, axis=(0, 1, 2), keepdims=True)
        v = jnp.mean(jnp.square(x - m), axis=(0, 1, 2), keepdims=True)
        return (x - m) * jax.lax.rsqrt(v + EPS) * g.reshape(1, 1, 1, -1) \
            + b.reshape(1, 1, 1, -1)

    h = jax.nn.relu(bn(conv(x_nhwc, w1_oihw), g1, b1))
    h = bn(conv(h, w2_oihw), g2, b2)
    return jax.nn.relu(h + x_nhwc)


if __name__ == "__main__":
    key = jax.random.PRNGKey(0)
    N, C, H, W = 2, 4, 16, 16          # inplanes == planes == 4, stride = 1
    planes = C
    k_x, k_w1, k_w2, k_g1, k_b1, k_g2, k_b2 = jax.random.split(key, 7)

    x_nchw = jax.random.normal(k_x, (N, C, H, W), jnp.float32)      # PyTorch layout
    w1_oihw = jax.random.normal(k_w1, (planes, C, 3, 3), jnp.float32) * 0.1
    w2_oihw = jax.random.normal(k_w2, (planes, planes, 3, 3), jnp.float32) * 0.1
    g1 = 1.0 + 0.1 * jax.random.normal(k_g1, (planes,), jnp.float32)
    b1 = 0.1 * jax.random.normal(k_b1, (planes,), jnp.float32)
    g2 = 1.0 + 0.1 * jax.random.normal(k_g2, (planes,), jnp.float32)
    b2 = 0.1 * jax.random.normal(k_b2, (planes,), jnp.float32)

    x_nhwc = jnp.transpose(x_nchw, (0, 2, 3, 1))                    # NCHW -> NHWC

    out = jax.block_until_ready(basic_block(x_nhwc, w1_oihw, w2_oihw, g1, b1, g2, b2))
    assert out.shape == (N, H, W, planes)

    # Primary check: reference with the same bf16 rounding of the MXU operands
    # (conv inputs/weights), f32 everywhere else -> must match tightly.
    ref_bf16 = jax.block_until_ready(
        _reference(x_nhwc, w1_oihw, w2_oihw, g1, b1, g2, b2, bf16_matmul=True))
    err_bf16 = float(jnp.max(jnp.abs(out - ref_bf16)))
    assert jnp.allclose(out, ref_bf16, atol=5e-3, rtol=5e-3), \
        f"bf16-matched reference max abs err {err_bf16}"

    # Sanity check against the strict f32 reference; the only divergence is
    # the bf16 rounding of the conv operands (standard TPU MXU practice).
    ref_f32 = jax.block_until_ready(
        _reference(x_nhwc, w1_oihw, w2_oihw, g1, b1, g2, b2, bf16_matmul=False))
    err_f32 = float(jnp.max(jnp.abs(out - ref_f32)))
    assert jnp.allclose(out, ref_f32, atol=5e-2, rtol=5e-2), \
        f"f32 reference max abs err {err_f32}"

    print("KERNEL_OK")
</pallas_src>

<mosaic_0001>
module attributes {stable_mosaic.version = 11 : i64} {
  func.func @_basic_block_kernel(%arg0: memref<2x16x64xf32, #tpu.memory_space<vmem>>, %arg1: memref<3x72x64xbf16, #tpu.memory_space<vmem>>, %arg2: memref<3x72x64xbf16, #tpu.memory_space<vmem>>, %arg3: memref<1x4xf32, #tpu.memory_space<vmem>>, %arg4: memref<1x4xf32, #tpu.memory_space<vmem>>, %arg5: memref<1x4xf32, #tpu.memory_space<vmem>>, %arg6: memref<1x4xf32, #tpu.memory_space<vmem>>, %arg7: memref<2x16x64xf32, #tpu.memory_space<vmem>>, %arg8: memref<2x18x72xf32, #tpu.memory_space<vmem>>, %arg9: memref<2x18x72xf32, #tpu.memory_space<vmem>>) attributes {dimension_semantics = [], scalar_prefetch = 0 : i64, scratch_operands = 2 : i64, tpu.core_type = #tpu.core_type<tc>} {
    %c0 = arith.constant 0 : index
    %c0_0 = arith.constant 0 : index
    %c0_1 = arith.constant 0 : index
    %0 = vector.load %arg0[%c0, %c0_0, %c0_1] : memref<2x16x64xf32, #tpu.memory_space<vmem>>, vector<2x16x64xf32>
    %cst = arith.constant 0.000000e+00 : f32
    %1 = vector.broadcast %cst : f32 to vector<2x1x72xf32>
    %cst_2 = arith.constant 0.000000e+00 : f32
    %2 = vector.broadcast %cst_2 : f32 to vector<2x18x4xf32>
    %c0_3 = arith.constant 0 : index
    %c0_4 = arith.constant 0 : index
    %c0_5 = arith.constant 0 : index
    %3 = vector.load %arg8[%c0_3, %c0_4, %c0_5] : memref<2x18x72xf32, #tpu.memory_space<vmem>>, vector<2x1x72xf32>
    tpu.vector_store %arg8[%c0_3, %c0_4, %c0_5], %1 {strides = array<i32>} : memref<2x18x72xf32, #tpu.memory_space<vmem>>, vector<2x1x72xf32>,
    %c0_6 = arith.constant 0 : index
    %c17 = arith.constant 17 : index
    %c0_7 = arith.constant 0 : index
    %4 = vector.load %arg8[%c0_6, %c17, %c0_7] : memref<2x18x72xf32, #tpu.memory_space<vmem>>, vector<2x1x72xf32>
    tpu.vector_store %arg8[%c0_6, %c17, %c0_7], %1 {strides = array<i32>} : memref<2x18x72xf32, #tpu.memory_space<vmem>>, vector<2x1x72xf32>,
    %c0_8 = arith.constant 0 : index
    %c0_9 = arith.constant 0 : index
    %c0_10 = arith.constant 0 : index
    %5 = vector.load %arg8[%c0_8, %c0_9, %c0_10] : memref<2x18x72xf32, #tpu.memory_space<vmem>>, vector<2x18x4xf32>
    tpu.vector_store %arg8[%c0_8, %c0_9, %c0_10], %2 {strides = array<i32>} : memref<2x18x72xf32, #tpu.memory_space<vmem>>, vector<2x18x4xf32>,
    %c0_11 = arith.constant 0 : index
    %c0_12 = arith.constant 0 : index
    %c68 = arith.constant 68 : index
    %6 = vector.load %arg8[%c0_11, %c0_12, %c68] : memref<2x18x72xf32, #tpu.memory_space<vmem>>, vector<2x18x4xf32>
    tpu.vector_store %arg8[%c0_11, %c0_12, %c68], %2 {strides = array<i32>} : memref<2x18x72xf32, #tpu.memory_space<vmem>>, vector<2x18x4xf32>,
    %c0_13 = arith.constant 0 : index
    %c1 = arith.constant 1 : index
    %c4 = arith.constant 4 : index
    %7 = vector.load %arg8[%c0_13, %c1, %c4] : memref<2x18x72xf32, #tpu.memory_space<vmem>>, vector<2x16x64xf32>
    tpu.vector_store %arg8[%c0_13, %c1, %c4], %0 {strides = array<i32>} : memref<2x18x72xf32, #tpu.memory_space<vmem>>, vector<2x16x64xf32>,
    %cst_14 = arith.constant 0.000000e+00 : f32
    %8 = vector.broadcast %cst_14 : f32 to vector<32x64xf32>
    %c0_15 = arith.constant 0 : index
    %c0_16 = arith.constant 0 : index
    %c0_17 = arith.constant 0 : index
    %9 = vector.load %arg8[%c0_15, %c0_16, %c0_17] : memref<2x18x72xf32, #tpu.memory_space<vmem>>, vector<2x16x72xf32>
    %10 = vector.shape_cast %9 : vector<2x16x72xf32> to vector<32x72xf32>
    %11 = arith.truncf %10 : vector<32x72xf32> to vector<32x72xbf16>
    %c0_18 = arith.constant 0 : index
    %c0_19 = arith.constant 0 : index
    %c0_20 = arith.constant 0 : index
    %12 = vector.load %arg1[%c0_18, %c0_19, %c0_20] : memref<3x72x64xbf16, #tpu.memory_space<vmem>>, vector<1x72x64xbf16>
    %13 = vector.shape_cast %12 : vector<1x72x64xbf16> to vector<72x64xbf16>
    %cst_21 = arith.constant dense<0.000000e+00> : vector<32x64xf32>
    %14 = tpu.matmul %11, %13, %cst_21 {dimension_numbers = #tpu.dot_dimension_numbers<[1], [0], [0], [1], [0, 0, 1, 1], [], []>} : vector<32x72xbf16>, vector<72x64xbf16>, vector<32x64xf32> -> vector<32x64xf32>
    %15 = arith.addf %8, %14 : vector<32x64xf32>
    %c0_22 = arith.constant 0 : index
    %c1_23 = arith.constant 1 : index
    %c0_24 = arith.constant 0 : index
    %16 = vector.load %arg8[%c0_22, %c1_23, %c0_24] : memref<2x18x72xf32, #tpu.memory_space<vmem>>, vector<2x16x72xf32>
    %17 = vector.shape_cast %16 : vector<2x16x72xf32> to vector<32x72xf32>
    %18 = arith.truncf %17 : vector<32x72xf32> to vector<32x72xbf16>
    %c1_25 = arith.constant 1 : index
    %c0_26 = arith.constant 0 : index
    %c0_27 = arith.constant 0 : index
    %19 = vector.load %arg1[%c1_25, %c0_26, %c0_27] : memref<3x72x64xbf16, #tpu.memory_space<vmem>>, vector<1x72x64xbf16>
    %20 = vector.shape_cast %19 : vector<1x72x64xbf16> to vector<72x64xbf16>
    %cst_28 = arith.constant dense<0.000000e+00> : vector<32x64xf32>
    %21 = tpu.matmul %18, %20, %cst_28 {dimension_numbers = #tpu.dot_dimension_numbers<[1], [0], [0], [1], [0, 0, 1, 1], [], []>} : vector<32x72xbf16>, vector<72x64xbf16>, vector<32x64xf32> -> vector<32x64xf32>
    %22 = arith.addf %15, %21 : vector<32x64xf32>
    %c0_29 = arith.constant 0 : index
    %c2 = arith.constant 2 : index
    %c0_30 = arith.constant 0 : index
    %23 = vector.load %arg8[%c0_29, %c2, %c0_30] : memref<2x18x72xf32, #tpu.memory_space<vmem>>, vector<2x16x72xf32>
    %24 = vector.shape_cast %23 : vector<2x16x72xf32> to vector<32x72xf32>
    %25 = arith.truncf %24 : vector<32x72xf32> to vector<32x72xbf16>
    %c2_31 = arith.constant 2 : index
    %c0_32 = arith.constant 0 : index
    %c0_33 = arith.constant 0 : index
    %26 = vector.load %arg1[%c2_31, %c0_32, %c0_33] : memref<3x72x64xbf16, #tpu.memory_space<vmem>>, vector<1x72x64xbf16>
    %27 = vector.shape_cast %26 : vector<1x72x64xbf16> to vector<72x64xbf16>
    %cst_34 = arith.constant dense<0.000000e+00> : vector<32x64xf32>
    %28 = tpu.matmul %25, %27, %cst_34 {dimension_numbers = #tpu.dot_dimension_numbers<[1], [0], [0], [1], [0, 0, 1, 1], [], []>} : vector<32x72xbf16>, vector<72x64xbf16>, vector<32x64xf32> -> vector<32x64xf32>
    %29 = arith.addf %22, %28 : vector<32x64xf32>
    %30 = arith.mulf %29, %29 : vector<32x64xf32>
    %31 = tpu.concatenate %29, %30 in 1 : vector<32x64xf32>, vector<32x64xf32> -> vector<32x128xf32>
    %cst_35 = arith.constant dense<0.000000e+00> : vector<128xf32>
    %32 = vector.multi_reduction <add>, %31, %cst_35 [0] : vector<32x128xf32> to vector<128xf32>
    %33 = vector.shape_cast %32 : vector<128xf32> to vector<1x128xf32>
    %34 = vector.extract_strided_slice %33 {offsets = [0, 0], sizes = [1, 64], strides = [1, 1]} : vector<1x128xf32> to vector<1x64xf32>
    %35 = vector.extract_strided_slice %34 {offsets = [0, 0], sizes = [1, 4], strides = [1, 1]} : vector<1x64xf32> to vector<1x4xf32>
    %36 = vector.extract_strided_slice %34 {offsets = [0, 4], sizes = [1, 4], strides = [1, 1]} : vector<1x64xf32> to vector<1x4xf32>
    %37 = arith.addf %35, %36 : vector<1x4xf32>
    %38 = vector.extract_strided_slice %34 {offsets = [0, 8], sizes = [1, 4], strides = [1, 1]} : vector<1x64xf32> to vector<1x4xf32>
    %39 = arith.addf %37, %38 : vector<1x4xf32>
    %40 = vector.extract_strided_slice %34 {offsets = [0, 12], sizes = [1, 4], strides = [1, 1]} : vector<1x64xf32> to vector<1x4xf32>
    %41 = arith.addf %39, %40 : vector<1x4xf32>
    %42 = vector.extract_strided_slice %34 {offsets = [0, 16], sizes = [1, 4], strides = [1, 1]} : vector<1x64xf32> to vector<1x4xf32>
    %43 = arith.addf %41, %42 : vector<1x4xf32>
    %44 = vector.extract_strided_slice %34 {offsets = [0, 20], sizes = [1, 4], strides = [1, 1]} : vector<1x64xf32> to vector<1x4xf32>
    %45 = arith.addf %43, %44 : vector<1x4xf32>
    %46 = vector.extract_strided_slice %34 {offsets = [0, 24], sizes = [1, 4], strides = [1, 1]} : vector<1x64xf32> to vector<1x4xf32>
    %47 = arith.addf %45, %46 : vector<1x4xf32>
    %48 = vector.extract_strided_slice %34 {offsets = [0, 28], sizes = [1, 4], strides = [1, 1]} : vector<1x64xf32> to vector<1x4xf32>
    %49 = arith.addf %47, %48 : vector<1x4xf32>
    %50 = vector.extract_strided_slice %34 {offsets = [0, 32], sizes = [1, 4], strides = [1, 1]} : vector<1x64xf32> to vector<1x4xf32>
    %51 = arith.addf %49, %50 : vector<1x4xf32>
    %52 = vector.extract_strided_slice %34 {offsets = [0, 36], sizes = [1, 4], strides = [1, 1]} : vector<1x64xf32> to vector<1x4xf32>
    %53 = arith.addf %51, %52 : vector<1x4xf32>
    %54 = vector.extract_strided_slice %34 {offsets = [0, 40], sizes = [1, 4], strides = [1, 1]} : vector<1x64xf32> to vector<1x4xf32>
    %55 = arith.addf %53, %54 : vector<1x4xf32>
    %56 = vector.extract_strided_slice %34 {offsets = [0, 44], sizes = [1, 4], strides = [1, 1]} : vector<1x64xf32> to vector<1x4xf32>
    %57 = arith.addf %55, %56 : vector<1x4xf32>
    %58 = vector.extract_strided_slice %34 {offsets = [0, 48], sizes = [1, 4], strides = [1, 1]} : vector<1x64xf32> to vector<1x4xf32>
    %59 = arith.addf %57, %58 : vector<1x4xf32>
    %60 = vector.extract_strided_slice %34 {offsets = [0, 52], sizes = [1, 4], strides = [1, 1]} : vector<1x64xf32> to vector<1x4xf32>
    %61 = arith.addf %59, %60 : vector<1x4xf32>
    %62 = vector.extract_strided_slice %34 {offsets = [0, 56], sizes = [1, 4], strides = [1, 1]} : vector<1x64xf32> to vector<1x4xf32>
    %63 = arith.addf %61, %62 : vector<1x4xf32>
    %64 = vector.extract_strided_slice %34 {offsets = [0, 60], sizes = [1, 4], strides = [1, 1]} : vector<1x64xf32> to vector<1x4xf32>
    %65 = arith.addf %63, %64 : vector<1x4xf32>
    %cst_36 = arith.constant 0.001953125 : f32
    %66 = vector.broadcast %cst_36 : f32 to vector<1x4xf32>
    %67 = arith.mulf %65, %66 : vector<1x4xf32>
    %68 = vector.extract_strided_slice %33 {offsets = [0, 64], sizes = [1, 64], strides = [1, 1]} : vector<1x128xf32> to vector<1x64xf32>
    %69 = vector.extract_strided_slice %68 {offsets = [0, 0], sizes = [1, 4], strides = [1, 1]} : vector<1x64xf32> to vector<1x4xf32>
    %70 = vector.extract_strided_slice %68 {offsets = [0, 4], sizes = [1, 4], strides = [1, 1]} : vector<1x64xf32> to vector<1x4xf32>
    %71 = arith.addf %69, %70 : vector<1x4xf32>
    %72 = vector.extract_strided_slice %68 {offsets = [0, 8], sizes = [1, 4], strides = [1, 1]} : vector<1x64xf32> to vector<1x4xf32>
    %73 = arith.addf %71, %72 : vector<1x4xf32>
    %74 = vector.extract_strided_slice %68 {offsets = [0, 12], sizes = [1, 4], strides = [1, 1]} : vector<1x64xf32> to vector<1x4xf32>
    %75 = arith.addf %73, %74 : vector<1x4xf32>
    %76 = vector.extract_strided_slice %68 {offsets = [0, 16], sizes = [1, 4], strides = [1, 1]} : vector<1x64xf32> to vector<1x4xf32>
    %77 = arith.addf %75, %76 : vector<1x4xf32>
    %78 = vector.extract_strided_slice %68 {offsets = [0, 20], sizes = [1, 4], strides = [1, 1]} : vector<1x64xf32> to vector<1x4xf32>
    %79 = arith.addf %77, %78 : vector<1x4xf32>
    %80 = vector.extract_strided_slice %68 {offsets = [0, 24], sizes = [1, 4], strides = [1, 1]} : vector<1x64xf32> to vector<1x4xf32>
    %81 = arith.addf %79, %80 : vector<1x4xf32>
    %82 = vector.extract_strided_slice %68 {offsets = [0, 28], sizes = [1, 4], strides = [1, 1]} : vector<1x64xf32> to vector<1x4xf32>
    %83 = arith.addf %81, %82 : vector<1x4xf32>
    %84 = vector.extract_strided_slice %68 {offsets = [0, 32], sizes = [1, 4], strides = [1, 1]} : vector<1x64xf32> to vector<1x4xf32>
    %85 = arith.addf %83, %84 : vector<1x4xf32>
    %86 = vector.extract_strided_slice %68 {offsets = [0, 36], sizes = [1, 4], strides = [1, 1]} : vector<1x64xf32> to vector<1x4xf32>
    %87 = arith.addf %85, %86 : vector<1x4xf32>
    %88 = vector.extract_strided_slice %68 {offsets = [0, 40], sizes = [1, 4], strides = [1, 1]} : vector<1x64xf32> to vector<1x4xf32>
    %89 = arith.addf %87, %88 : vector<1x4xf32>
    %90 = vector.extract_strided_slice %68 {offsets = [0, 44], sizes = [1, 4], strides = [1, 1]} : vector<1x64xf32> to vector<1x4xf32>
    %91 = arith.addf %89, %90 : vector<1x4xf32>
    %92 = vector.extract_strided_slice %68 {offsets = [0, 48], sizes = [1, 4], strides = [1, 1]} : vector<1x64xf32> to vector<1x4xf32>
    %93 = arith.addf %91, %92 : vector<1x4xf32>
    %94 = vector.extract_strided_slice %68 {offsets = [0, 52], sizes = [1, 4], strides = [1, 1]} : vector<1x64xf32> to vector<1x4xf32>
    %95 = arith.addf %93, %94 : vector<1x4xf32>
    %96 = vector.extract_strided_slice %68 {offsets = [0, 56], sizes = [1, 4], strides = [1, 1]} : vector<1x64xf32> to vector<1x4xf32>
    %97 = arith.addf %95, %96 : vector<1x4xf32>
    %98 = vector.extract_strided_slice %68 {offsets = [0, 60], sizes = [1, 4], strides = [1, 1]} : vector<1x64xf32> to vector<1x4xf32>
    %99 = arith.addf %97, %98 : vector<1x4xf32>
    %cst_37 = arith.constant 0.001953125 : f32
    %100 = vector.broadcast %cst_37 : f32 to vector<1x4xf32>
    %101 = arith.mulf %99, %100 : vector<1x4xf32>
    %102 = arith.mulf %67, %67 : vector<1x4xf32>
    %103 = arith.subf %101, %102 : vector<1x4xf32>
    %c0_38 = arith.constant 0 : index
    %c0_39 = arith.constant 0 : index
    %104 = vector.load %arg3[%c0_38, %c0_39] : memref<1x4xf32, #tpu.memory_space<vmem>>, vector<1x4xf32>
    %cst_40 = arith.constant 9.99999974E-6 : f32
    %105 = vector.broadcast %cst_40 : f32 to vector<1x4xf32>
    %106 = arith.addf %103, %105 : vector<1x4xf32>
    %107 = math.rsqrt %106 : vector<1x4xf32>
    %108 = arith.mulf %104, %107 : vector<1x4xf32>
    %c0_41 = arith.constant 0 : index
    %c0_42 = arith.constant 0 : index
    %109 = vector.load %arg4[%c0_41, %c0_42] : memref<1x4xf32, #tpu.memory_space<vmem>>, vector<1x4xf32>
    %110 = arith.mulf %67, %108 : vector<1x4xf32>
    %111 = arith.subf %109, %110 : vector<1x4xf32>
    %112 = tpu.concatenate %108, %108, %108, %108, %108, %108, %108, %108, %108, %108, %108, %108, %108, %108, %108, %108 in 1 : vector<1x4xf32>, vector<1x4xf32>, vector<1x4xf32>, vector<1x4xf32>, vector<1x4xf32>, vector<1x4xf32>, vector<1x4xf32>, vector<1x4xf32>, vector<1x4xf32>, vector<1x4xf32>, vector<1x4xf32>, vector<1x4xf32>, vector<1x4xf32>, vector<1x4xf32>, vector<1x4xf32>, vector<1x4xf32> -> vector<1x64xf32>
    %113 = tpu.concatenate %111, %111, %111, %111, %111, %111, %111, %111, %111, %111, %111, %111, %111, %111, %111, %111 in 1 : vector<1x4xf32>, vector<1x4xf32>, vector<1x4xf32>, vector<1x4xf32>, vector<1x4xf32>, vector<1x4xf32>, vector<1x4xf32>, vector<1x4xf32>, vector<1x4xf32>, vector<1x4xf32>, vector<1x4xf32>, vector<1x4xf32>, vector<1x4xf32>, vector<1x4xf32>, vector<1x4xf32>, vector<1x4xf32> -> vector<1x64xf32>
    %114 = vector.broadcast %112 : vector<1x64xf32> to vector<32x64xf32>
    %115 = arith.mulf %29, %114 : vector<32x64xf32>
    %116 = vector.broadcast %113 : vector<1x64xf32> to vector<32x64xf32>
    %117 = arith.addf %115, %116 : vector<32x64xf32>
    %cst_43 = arith.constant 0.000000e+00 : f32
    %118 = vector.broadcast %cst_43 : f32 to vector<32x64xf32>
    %119 = arith.maximumf %117, %118 : vector<32x64xf32>
    %120 = vector.shape_cast %119 : vector<32x64xf32> to vector<2x16x64xf32>
    %cst_44 = arith.constant 0.000000e+00 : f32
    %121 = vector.broadcast %cst_44 : f32 to vector<2x1x72xf32>
    %cst_45 = arith.constant 0.000000e+00 : f32
    %122 = vector.broadcast %cst_45 : f32 to vector<2x18x4xf32>
    %c0_46 = arith.constant 0 : index
    %c0_47 = arith.constant 0 : index
    %c0_48 = arith.constant 0 : index
    %123 = vector.load %arg9[%c0_46, %c0_47, %c0_48] : memref<2x18x72xf32, #tpu.memory_space<vmem>>, vector<2x1x72xf32>
    tpu.vector_store %arg9[%c0_46, %c0_47, %c0_48], %121 {strides = array<i32>} : memref<2x18x72xf32, #tpu.memory_space<vmem>>, vector<2x1x72xf32>,
    %c0_49 = arith.constant 0 : index
    %c17_50 = arith.constant 17 : index
    %c0_51 = arith.constant 0 : index
    %124 = vector.load %arg9[%c0_49, %c17_50, %c0_51] : memref<2x18x72xf32, #tpu.memory_space<vmem>>, vector<2x1x72xf32>
    tpu.vector_store %arg9[%c0_49, %c17_50, %c0_51], %121 {strides = array<i32>} : memref<2x18x72xf32, #tpu.memory_space<vmem>>, vector<2x1x72xf32>,
    %c0_52 = arith.constant 0 : index
    %c0_53 = arith.constant 0 : index
    %c0_54 = arith.constant 0 : index
    %125 = vector.load %arg9[%c0_52, %c0_53, %c0_54] : memref<2x18x72xf32, #tpu.memory_space<vmem>>, vector<2x18x4xf32>
    tpu.vector_store %arg9[%c0_52, %c0_53, %c0_54], %122 {strides = array<i32>} : memref<2x18x72xf32, #tpu.memory_space<vmem>>, vector<2x18x4xf32>,
    %c0_55 = arith.constant 0 : index
    %c0_56 = arith.constant 0 : index
    %c68_57 = arith.constant 68 : index
    %126 = vector.load %arg9[%c0_55, %c0_56, %c68_57] : memref<2x18x72xf32, #tpu.memory_space<vmem>>, vector<2x18x4xf32>
    tpu.vector_store %arg9[%c0_55, %c0_56, %c68_57], %122 {strides = array<i32>} : memref<2x18x72xf32, #tpu.memory_space<vmem>>, vector<2x18x4xf32>,
    %c0_58 = arith.constant 0 : index
    %c1_59 = arith.constant 1 : index
    %c4_60 = arith.constant 4 : index
    %127 = vector.load %arg9[%c0_58, %c1_59, %c4_60] : memref<2x18x72xf32, #tpu.memory_space<vmem>>, vector<2x16x64xf32>
    tpu.vector_store %arg9[%c0_58, %c1_59, %c4_60], %120 {strides = array<i32>} : memref<2x18x72xf32, #tpu.memory_space<vmem>>, vector<2x16x64xf32>,
    %cst_61 = arith.constant 0.000000e+00 : f32
    %128 = vector.broadcast %cst_61 : f32 to vector<32x64xf32>
    %c0_62 = arith.constant 0 : index
    %c0_63 = arith.constant 0 : index
    %c0_64 = arith.constant 0 : index
    %129 = vector.load %arg9[%c0_62, %c0_63, %c0_64] : memref<2x18x72xf32, #tpu.memory_space<vmem>>, vector<2x16x72xf32>
    %130 = vector.shape_cast %129 : vector<2x16x72xf32> to vector<32x72xf32>
    %131 = arith.truncf %130 : vector<32x72xf32> to vector<32x72xbf16>
    %c0_65 = arith.constant 0 : index
    %c0_66 = arith.constant 0 : index
    %c0_67 = arith.constant 0 : index
    %132 = vector.load %arg2[%c0_65, %c0_66, %c0_67] : memref<3x72x64xbf16, #tpu.memory_space<vmem>>, vector<1x72x64xbf16>
    %133 = vector.shape_cast %132 : vector<1x72x64xbf16> to vector<72x64xbf16>
    %cst_68 = arith.constant dense<0.000000e+00> : vector<32x64xf32>
    %134 = tpu.matmul %131, %133, %cst_68 {dimension_numbers = #tpu.dot_dimension_numbers<[1], [0], [0], [1], [0, 0, 1, 1], [], []>} : vector<32x72xbf16>, vector<72x64xbf16>, vector<32x64xf32> -> vector<32x64xf32>
    %135 = arith.addf %128, %134 : vector<32x64xf32>
    %c0_69 = arith.constant 0 : index
    %c1_70 = arith.constant 1 : index
    %c0_71 = arith.constant 0 : index
    %136 = vector.load %arg9[%c0_69, %c1_70, %c0_71] : memref<2x18x72xf32, #tpu.memory_space<vmem>>, vector<2x16x72xf32>
    %137 = vector.shape_cast %136 : vector<2x16x72xf32> to vector<32x72xf32>
    %138 = arith.truncf %137 : vector<32x72xf32> to vector<32x72xbf16>
    %c1_72 = arith.constant 1 : index
    %c0_73 = arith.constant 0 : index
    %c0_74 = arith.constant 0 : index
    %139 = vector.load %arg2[%c1_72, %c0_73, %c0_74] : memref<3x72x64xbf16, #tpu.memory_space<vmem>>, vector<1x72x64xbf16>
    %140 = vector.shape_cast %139 : vector<1x72x64xbf16> to vector<72x64xbf16>
    %cst_75 = arith.constant dense<0.000000e+00> : vector<32x64xf32>
    %141 = tpu.matmul %138, %140, %cst_75 {dimension_numbers = #tpu.dot_dimension_numbers<[1], [0], [0], [1], [0, 0, 1, 1], [], []>} : vector<32x72xbf16>, vector<72x64xbf16>, vector<32x64xf32> -> vector<32x64xf32>
    %142 = arith.addf %135, %141 : vector<32x64xf32>
    %c0_76 = arith.constant 0 : index
    %c2_77 = arith.constant 2 : index
    %c0_78 = arith.constant 0 : index
    %143 = vector.load %arg9[%c0_76, %c2_77, %c0_78] : memref<2x18x72xf32, #tpu.memory_space<vmem>>, vector<2x16x72xf32>
    %144 = vector.shape_cast %143 : vector<2x16x72xf32> to vector<32x72xf32>
    %145 = arith.truncf %144 : vector<32x72xf32> to vector<32x72xbf16>
    %c2_79 = arith.constant 2 : index
    %c0_80 = arith.constant 0 : index
    %c0_81 = arith.constant 0 : index
    %146 = vector.load %arg2[%c2_79, %c0_80, %c0_81] : memref<3x72x64xbf16, #tpu.memory_space<vmem>>, vector<1x72x64xbf16>
    %147 = vector.shape_cast %146 : vector<1x72x64xbf16> to vector<72x64xbf16>
    %cst_82 = arith.constant dense<0.000000e+00> : vector<32x64xf32>
    %148 = tpu.matmul %145, %147, %cst_82 {dimension_numbers = #tpu.dot_dimension_numbers<[1], [0], [0], [1], [0, 0, 1, 1], [], []>} : vector<32x72xbf16>, vector<72x64xbf16>, vector<32x64xf32> -> vector<32x64xf32>
    %149 = arith.addf %142, %148 : vector<32x64xf32>
    %150 = arith.mulf %149, %149 : vector<32x64xf32>
    %151 = tpu.concatenate %149, %150 in 1 : vector<32x64xf32>, vector<32x64xf32> -> vector<32x128xf32>
    %cst_83 = arith.constant dense<0.000000e+00> : vector<128xf32>
    %152 = vector.multi_reduction <add>, %151, %cst_83 [0] : vector<32x128xf32> to vector<128xf32>
    %153 = vector.shape_cast %152 : vector<128xf32> to vector<1x128xf32>
    %154 = vector.extract_strided_slice %153 {offsets = [0, 0], sizes = [1, 64], strides = [1, 1]} : vector<1x128xf32> to vector<1x64xf32>
    %155 = vector.extract_strided_slice %154 {offsets = [0, 0], sizes = [1, 4], strides = [1, 1]} : vector<1x64xf32> to vector<1x4xf32>
    %156 = vector.extract_strided_slice %154 {offsets = [0, 4], sizes = [1, 4], strides = [1, 1]} : vector<1x64xf32> to vector<1x4xf32>
    %157 = arith.addf %155, %156 : vector<1x4xf32>
    %158 = vector.extract_strided_slice %154 {offsets = [0, 8], sizes = [1, 4], strides = [1, 1]} : vector<1x64xf32> to vector<1x4xf32>
    %159 = arith.addf %157, %158 : vector<1x4xf32>
    %160 = vector.extract_strided_slice %154 {offsets = [0, 12], sizes = [1, 4], strides = [1, 1]} : vector<1x64xf32> to vector<1x4xf32>
    %161 = arith.addf %159, %160 : vector<1x4xf32>
    %162 = vector.extract_strided_slice %154 {offsets = [0, 16], sizes = [1, 4], strides = [1, 1]} : vector<1x64xf32> to vector<1x4xf32>
    %163 = arith.addf %161, %162 : vector<1x4xf32>
    %164 = vector.extract_strided_slice %154 {offsets = [0, 20], sizes = [1, 4], strides = [1, 1]} : vector<1x64xf32> to vector<1x4xf32>
    %165 = arith.addf %163, %164 : vector<1x4xf32>
    %166 = vector.extract_strided_slice %154 {offsets = [0, 24], sizes = [1, 4], strides = [1, 1]} : vector<1x64xf32> to vector<1x4xf32>
    %167 = arith.addf %165, %166 : vector<1x4xf32>
    %168 = vector.extract_strided_slice %154 {offsets = [0, 28], sizes = [1, 4], strides = [1, 1]} : vector<1x64xf32> to vector<1x4xf32>
    %169 = arith.addf %167, %168 : vector<1x4xf32>
    %170 = vector.extract_strided_slice %154 {offsets = [0, 32], sizes = [1, 4], strides = [1, 1]} : vector<1x64xf32> to vector<1x4xf32>
    %171 = arith.addf %169, %170 : vector<1x4xf32>
    %172 = vector.extract_strided_slice %154 {offsets = [0, 36], sizes = [1, 4], strides = [1, 1]} : vector<1x64xf32> to vector<1x4xf32>
    %173 = arith.addf %171, %172 : vector<1x4xf32>
    %174 = vector.extract_strided_slice %154 {offsets = [0, 40], sizes = [1, 4], strides = [1, 1]} : vector<1x64xf32> to vector<1x4xf32>
    %175 = arith.addf %173, %174 : vector<1x4xf32>
    %176 = vector.extract_strided_slice %154 {offsets = [0, 44], sizes = [1, 4], strides = [1, 1]} : vector<1x64xf32> to vector<1x4xf32>
    %177 = arith.addf %175, %176 : vector<1x4xf32>
    %178 = vector.extract_strided_slice %154 {offsets = [0, 48], sizes = [1, 4], strides = [1, 1]} : vector<1x64xf32> to vector<1x4xf32>
    %179 = arith.addf %177, %178 : vector<1x4xf32>
    %180 = vector.extract_strided_slice %154 {offsets = [0, 52], sizes = [1, 4], strides = [1, 1]} : vector<1x64xf32> to vector<1x4xf32>
    %181 = arith.addf %179, %180 : vector<1x4xf32>
    %182 = vector.extract_strided_slice %154 {offsets = [0, 56], sizes = [1, 4], strides = [1, 1]} : vector<1x64xf32> to vector<1x4xf32>
    %183 = arith.addf %181, %182 : vector<1x4xf32>
    %184 = vector.extract_strided_slice %154 {offsets = [0, 60], sizes = [1, 4], strides = [1, 1]} : vector<1x64xf32> to vector<1x4xf32>
    %185 = arith.addf %183, %184 : vector<1x4xf32>
    %cst_84 = arith.constant 0.001953125 : f32
    %186 = vector.broadcast %cst_84 : f32 to vector<1x4xf32>
    %187 = arith.mulf %185, %186 : vector<1x4xf32>
    %188 = vector.extract_strided_slice %153 {offsets = [0, 64], sizes = [1, 64], strides = [1, 1]} : vector<1x128xf32> to vector<1x64xf32>
    %189 = vector.extract_strided_slice %188 {offsets = [0, 0], sizes = [1, 4], strides = [1, 1]} : vector<1x64xf32> to vector<1x4xf32>
    %190 = vector.extract_strided_slice %188 {offsets = [0, 4], sizes = [1, 4], strides = [1, 1]} : vector<1x64xf32> to vector<1x4xf32>
    %191 = arith.addf %189, %190 : vector<1x4xf32>
    %192 = vector.extract_strided_slice %188 {offsets = [0, 8], sizes = [1, 4], strides = [1, 1]} : vector<1x64xf32> to vector<1x4xf32>
    %193 = arith.addf %191, %192 : vector<1x4xf32>
    %194 = vector.extract_strided_slice %188 {offsets = [0, 12], sizes = [1, 4], strides = [1, 1]} : vector<1x64xf32> to vector<1x4xf32>
    %195 = arith.addf %193, %194 : vector<1x4xf32>
    %196 = vector.extract_strided_slice %188 {offsets = [0, 16], sizes = [1, 4], strides = [1, 1]} : vector<1x64xf32> to vector<1x4xf32>
    %197 = arith.addf %195, %196 : vector<1x4xf32>
    %198 = vector.extract_strided_slice %188 {offsets = [0, 20], sizes = [1, 4], strides = [1, 1]} : vector<1x64xf32> to vector<1x4xf32>
    %199 = arith.addf %197, %198 : vector<1x4xf32>
    %200 = vector.extract_strided_slice %188 {offsets = [0, 24], sizes = [1, 4], strides = [1, 1]} : vector<1x64xf32> to vector<1x4xf32>
    %201 = arith.addf %199, %200 : vector<1x4xf32>
    %202 = vector.extract_strided_slice %188 {offsets = [0, 28], sizes = [1, 4], strides = [1, 1]} : vector<1x64xf32> to vector<1x4xf32>
    %203 = arith.addf %201, %202 : vector<1x4xf32>
    %204 = vector.extract_strided_slice %188 {offsets = [0, 32], sizes = [1, 4], strides = [1, 1]} : vector<1x64xf32> to vector<1x4xf32>
    %205 = arith.addf %203, %204 : vector<1x4xf32>
    %206 = vector.extract_strided_slice %188 {offsets = [0, 36], sizes = [1, 4], strides = [1, 1]} : vector<1x64xf32> to vector<1x4xf32>
    %207 = arith.addf %205, %206 : vector<1x4xf32>
    %208 = vector.extract_strided_slice %188 {offsets = [0, 40], sizes = [1, 4], strides = [1, 1]} : vector<1x64xf32> to vector<1x4xf32>
    %209 = arith.addf %207, %208 : vector<1x4xf32>
    %210 = vector.extract_strided_slice %188 {offsets = [0, 44], sizes = [1, 4], strides = [1, 1]} : vector<1x64xf32> to vector<1x4xf32>
    %211 = arith.addf %209, %210 : vector<1x4xf32>
    %212 = vector.extract_strided_slice %188 {offsets = [0, 48], sizes = [1, 4], strides = [1, 1]} : vector<1x64xf32> to vector<1x4xf32>
    %213 = arith.addf %211, %212 : vector<1x4xf32>
    %214 = vector.extract_strided_slice %188 {offsets = [0, 52], sizes = [1, 4], strides = [1, 1]} : vector<1x64xf32> to vector<1x4xf32>
    %215 = arith.addf %213, %214 : vector<1x4xf32>
    %216 = vector.extract_strided_slice %188 {offsets = [0, 56], sizes = [1, 4], strides = [1, 1]} : vector<1x64xf32> to vector<1x4xf32>
    %217 = arith.addf %215, %216 : vector<1x4xf32>
    %218 = vector.extract_strided_slice %188 {offsets = [0, 60], sizes = [1, 4], strides = [1, 1]} : vector<1x64xf32> to vector<1x4xf32>
    %219 = arith.addf %217, %218 : vector<1x4xf32>
    %cst_85 = arith.constant 0.001953125 : f32
    %220 = vector.broadcast %cst_85 : f32 to vector<1x4xf32>
    %221 = arith.mulf %219, %220 : vector<1x4xf32>
    %222 = arith.mulf %187, %187 : vector<1x4xf32>
    %223 = arith.subf %221, %222 : vector<1x4xf32>
    %c0_86 = arith.constant 0 : index
    %c0_87 = arith.constant 0 : index
    %224 = vector.load %arg5[%c0_86, %c0_87] : memref<1x4xf32, #tpu.memory_space<vmem>>, vector<1x4xf32>
    %cst_88 = arith.constant 9.99999974E-6 : f32
    %225 = vector.broadcast %cst_88 : f32 to vector<1x4xf32>
    %226 = arith.addf %223, %225 : vector<1x4xf32>
    %227 = math.rsqrt %226 : vector<1x4xf32>
    %228 = arith.mulf %224, %227 : vector<1x4xf32>
    %c0_89 = arith.constant 0 : index
    %c0_90 = arith.constant 0 : index
    %229 = vector.load %arg6[%c0_89, %c0_90] : memref<1x4xf32, #tpu.memory_space<vmem>>, vector<1x4xf32>
    %230 = arith.mulf %187, %228 : vector<1x4xf32>
    %231 = arith.subf %229, %230 : vector<1x4xf32>
    %232 = tpu.concatenate %228, %228, %228, %228, %228, %228, %228, %228, %228, %228, %228, %228, %228, %228, %228, %228 in 1 : vector<1x4xf32>, vector<1x4xf32>, vector<1x4xf32>, vector<1x4xf32>, vector<1x4xf32>, vector<1x4xf32>, vector<1x4xf32>, vector<1x4xf32>, vector<1x4xf32>, vector<1x4xf32>, vector<1x4xf32>, vector<1x4xf32>, vector<1x4xf32>, vector<1x4xf32>, vector<1x4xf32>, vector<1x4xf32> -> vector<1x64xf32>
    %233 = tpu.concatenate %231, %231, %231, %231, %231, %231, %231, %231, %231, %231, %231, %231, %231, %231, %231, %231 in 1 : vector<1x4xf32>, vector<1x4xf32>, vector<1x4xf32>, vector<1x4xf32>, vector<1x4xf32>, vector<1x4xf32>, vector<1x4xf32>, vector<1x4xf32>, vector<1x4xf32>, vector<1x4xf32>, vector<1x4xf32>, vector<1x4xf32>, vector<1x4xf32>, vector<1x4xf32>, vector<1x4xf32>, vector<1x4xf32> -> vector<1x64xf32>
    %234 = vector.broadcast %232 : vector<1x64xf32> to vector<32x64xf32>
    %235 = arith.mulf %149, %234 : vector<32x64xf32>
    %236 = vector.broadcast %233 : vector<1x64xf32> to vector<32x64xf32>
    %237 = arith.addf %235, %236 : vector<32x64xf32>
    %c0_91 = arith.constant 0 : index
    %c0_92 = arith.constant 0 : index
    %c0_93 = arith.constant 0 : index
    %238 = vector.load %arg0[%c0_91, %c0_92, %c0_93] : memref<2x16x64xf32, #tpu.memory_space<vmem>>, vector<2x16x64xf32>
    %239 = vector.shape_cast %238 : vector<2x16x64xf32> to vector<32x64xf32>
    %240 = arith.addf %237, %239 : vector<32x64xf32>
    %cst_94 = arith.constant 0.000000e+00 : f32
    %241 = vector.broadcast %cst_94 : f32 to vector<32x64xf32>
    %242 = arith.maximumf %240, %241 : vector<32x64xf32>
    %243 = vector.shape_cast %242 : vector<32x64xf32> to vector<2x16x64xf32>
    %c0_95 = arith.constant 0 : index
    %c0_96 = arith.constant 0 : index
    %c0_97 = arith.constant 0 : index
    %244 = vector.load %arg7[%c0_95, %c0_96, %c0_97] : memref<2x16x64xf32, #tpu.memory_space<vmem>>, vector<2x16x64xf32>
    tpu.vector_store %arg7[%c0_95, %c0_96, %c0_97], %243 {strides = array<i32>} : memref<2x16x64xf32, #tpu.memory_space<vmem>>, vector<2x16x64xf32>,
    return
  }
}

</mosaic_0001>

<llo_original>
// kernel: tpu_custom_call.1
$region0: #{tpu_custom_call.1}
  #allocation0 [shape = 'u32[]', space=smem, size = 0x4, offset = 0x4, fixed_abs, tag = 'smem constant byte address 0x4 - core index']
  #allocation1 [shape = 'u32[144,128]{1,0:T(1,128)}', space=vmem, size = 0x12000, scoped, tag = 'internal scratch']
  #allocation2 [shape = 'f32[2,18,72]{2,1,0:T(8,128)}', space=vmem, size = 0x6000, scoped, tag = 'scratch operand']
  #allocation3 [shape = 'f32[2,18,72]{2,1,0:T(8,128)}', space=vmem, size = 0x6000, scoped, tag = 'scratch operand']
  %s0 = inlined_call_operand.vmem [shape: f32[2,16,64], index: 0, kind: input, shape index: {}]
  %s1 = inlined_call_operand.vmem [shape: bf16[3,72,64], index: 1, kind: input, shape index: {}]
  %s2 = inlined_call_operand.vmem [shape: bf16[3,72,64], index: 2, kind: input, shape index: {}]
  %s3 = inlined_call_operand.vmem [shape: f32[1,4], index: 3, kind: input, shape index: {}]
  %s4 = inlined_call_operand.vmem [shape: f32[1,4], index: 4, kind: input, shape index: {}]
  %s5 = inlined_call_operand.vmem [shape: f32[1,4], index: 5, kind: input, shape index: {}]
  %s6 = inlined_call_operand.vmem [shape: f32[1,4], index: 6, kind: input, shape index: {}]
  %s7 = inlined_call_operand.hbm [shape: f32[2,16,64], index: 7, kind: output, shape index: {}]
  %s8 = sld [smem:[#allocation0]]
  $region38: #{tpu_custom_call.1} parent=0
    _
  %s10 = ssub.s32 1, %s8
  %s11 = scalar_select 0, %s10, %s8
  $region1: #{tpu_custom_call.1} parent=0
    #allocation4 [shape = 'u8[16384]{0}', space=vmem, size = 0x4000, scoped, tag = 'output window, operand 0, single buffered']
    #allocation5 [shape = 's32[1]{0}', space=sflag, size = 0x4, scoped, tag = 'scoped memory for tpu_custom_call.1']
    %12 = vsyncpa [#allocation5], 0
    // Predicated region
    $region2: #{tpu_custom_call.1} parent=1 // pred_check
      _
    $region3: #{tpu_custom_call.1} parent=1 // pred_check_branch
      %14 = sbr.rel (0) target = $region5
    $region4: #{tpu_custom_call.1} parent=1 // pred_region
      _
    $region5: #{tpu_custom_call.1} parent=1 // pred_fallthru
      _
    // Predicated region
    $region6: #{tpu_custom_call.1} parent=1 // pred_check
      _
    $region7: #{tpu_custom_call.1} parent=1 // pred_check_branch
      %16 = sbr.rel (0) target = $region9
    $region8: #{tpu_custom_call.1} parent=1 // pred_region
      _
    $region9: #{tpu_custom_call.1} parent=1 // pred_fallthru
      _
    // Predicated region
    $region10: #{tpu_custom_call.1} parent=1 // pred_check
      _
    $region11: #{tpu_custom_call.1} parent=1 // pred_check_branch
      %18 = sbr.rel (0) target = $region13
    $region12: #{tpu_custom_call.1} parent=1 // pred_region
      _
    $region13: #{tpu_custom_call.1} parent=1 // pred_fallthru
      _
    // Predicated region
    $region14: #{tpu_custom_call.1} parent=1 // pred_check
      _
    $region15: #{tpu_custom_call.1} parent=1 // pred_check_branch
      %20 = sbr.rel (0) target = $region17
    $region16: #{tpu_custom_call.1} parent=1 // pred_region
      _
    $region17: #{tpu_custom_call.1} parent=1 // pred_fallthru
      _
    // Predicated region
    $region18: #{tpu_custom_call.1} parent=1 // pred_check
      _
    $region19: #{tpu_custom_call.1} parent=1 // pred_check_branch
      %22 = sbr.rel (0) target = $region21
    $region20: #{tpu_custom_call.1} parent=1 // pred_region
      _
    $region21: #{tpu_custom_call.1} parent=1 // pred_fallthru
      _
    // Predicated region
    $region22: #{tpu_custom_call.1} parent=1 // pred_check
      _
    $region23: #{tpu_custom_call.1} parent=1 // pred_check_branch
      %24 = sbr.rel (0) target = $region25
    $region24: #{tpu_custom_call.1} parent=1 // pred_region
      _
    $region25: #{tpu_custom_call.1} parent=1 // pred_fallthru
      _
    // Predicated region
    $region26: #{tpu_custom_call.1} parent=1 // pred_check
      _
    $region27: #{tpu_custom_call.1} parent=1 // pred_check_branch
      %26 = sbr.rel (0) target = $region29
    $region28: #{tpu_custom_call.1} parent=1 // pred_region
      _
    $region29: #{tpu_custom_call.1} parent=1 // pred_fallthru
      _
    %v28 = vld [vmem:[%s0] sm:$0xff]
    %v29 = vld [vmem:[%s0 + $0x8] sm:$0xff]
    %v30 = vld [vmem:[%s0 + $0x10] sm:$0xff]
    %v31 = vld [vmem:[%s0 + $0x18] sm:$0xff]
    %vm32 = vcmask 581632
    %33 = vst.msk [vmem:[#allocation2] sm:$0x1] %vm32, 0.0
    %34 = vst.msk [vmem:[#allocation2 + $0x18] sm:$0x1] %vm32, 0.0
    %35 = vst.msk [vmem:[#allocation2 + $0x11] sm:$0x1] %vm32, 0.0
    %36 = vst.msk [vmem:[#allocation2 + $0x29] sm:$0x1] %vm32, 0.0
    %vm37 = vcmask 31744
    %38 = vst.msk [vmem:[#allocation2] sm:$0xff] %vm37, 0.0
    %39 = vst.msk [vmem:[#allocation2 + $0x8] sm:$0xff] %vm37, 0.0
    %vm40 = vcmask 25600
    %41 = vst.msk [vmem:[#allocation2 + $0x10] sm:$0x3] %vm40, 0.0
    %42 = vst.msk [vmem:[#allocation2 + $0x18] sm:$0xff] %vm37, 0.0
    %43 = vst.msk [vmem:[#allocation2 + $0x20] sm:$0xff] %vm37, 0.0
    %44 = vst.msk [vmem:[#allocation2 + $0x28] sm:$0x3] %vm40, 0.0
    %vm45 = vcmask 589344
    %46 = vst.msk [vmem:[#allocation2] sm:$0xff] %vm45, 0.0
    %47 = vst.msk [vmem:[#allocation2 + $0x8] sm:$0xff] %vm45, 0.0
    %vm48 = vcmask 583200
    %49 = vst.msk [vmem:[#allocation2 + $0x10] sm:$0x3] %vm48, 0.0
    %50 = vst.msk [vmem:[#allocation2 + $0x18] sm:$0xff] %vm45, 0.0
    %51 = vst.msk [vmem:[#allocation2 + $0x20] sm:$0xff] %vm45, 0.0
    %52 = vst.msk [vmem:[#allocation2 + $0x28] sm:$0x3] %vm48, 0.0
    %57 = vrot.lane.b32.xlu0 %v28, 4
    %v58 = vpop.permute.xlu0 %57
    %59 = vrot.lane.b32.xlu0 %v29, 4
    %v60 = vpop.permute.xlu0 %59
    %61 = vrot.lane.b32.xlu0 %v30, 4
    %v62 = vpop.permute.xlu0 %61
    %63 = vrot.lane.b32.xlu0 %v31, 4
    %v64 = vpop.permute.xlu0 %63
    %vm69 = vcmask 556064
    %70 = vst.msk [vmem:[#allocation2 + $0x1] sm:$0xff] %vm69, %v58
    %71 = vst.msk [vmem:[#allocation2 + $0x9] sm:$0xff] %vm69, %v60
    %72 = vst.msk [vmem:[#allocation2 + $0x19] sm:$0xff] %vm69, %v62
    %73 = vst.msk [vmem:[#allocation2 + $0x21] sm:$0xff] %vm69, %v64
    %v74 = vld [vmem:[#allocation2] sm:$0xff]
    %v75 = vld [vmem:[#allocation2 + $0x8] sm:$0xff]
    %v76 = vld [vmem:[#allocation2 + $0x18] sm:$0xff]
    %v77 = vld [vmem:[#allocation2 + $0x20] sm:$0xff]
    %v78 = vpack.c.bf16 %v75, %v74
    %v79 = vpack.c.bf16 %v77, %v76
    %v80 = vld [vmem:[%s1] sm:$0xf]
    %v81 = vld [vmem:[%s1 + $0x4] sm:$0xf]
    %v82 = vld [vmem:[%s1 + $0x8] sm:$0xf]
    %v83 = vld [vmem:[%s1 + $0xc] sm:$0xf]
    %v84 = vld [vmem:[%s1 + $0x10] sm:$0xf]
    %v85 = vld [vmem:[%s1 + $0x14] sm:$0xf]
    %v86 = vld [vmem:[%s1 + $0x18] sm:$0xf]
    %v87 = vld [vmem:[%s1 + $0x1c] sm:$0xf]
    %v88 = vld [vmem:[%s1 + $0x20] sm:$0xf]
    %v89 = vld [vmem:[#allocation2 + $0x1] sm:$0xff]
    %v90 = vld [vmem:[#allocation2 + $0x9] sm:$0xff]
    %v91 = vld [vmem:[#allocation2 + $0x19] sm:$0xff]
    %v92 = vld [vmem:[#allocation2 + $0x21] sm:$0xff]
    %v93 = vpack.c.bf16 %v90, %v89
    %v94 = vpack.c.bf16 %v92, %v91
    %s95 = scalar_lea.vmem %s1, 36
    %v96 = vld [vmem:[%s95] sm:$0xf]
    %v97 = vld [vmem:[%s95 + $0x4] sm:$0xf]
    %v98 = vld [vmem:[%s95 + $0x8] sm:$0xf]
    %v99 = vld [vmem:[%s95 + $0xc] sm:$0xf]
    %v100 = vld [vmem:[%s95 + $0x10] sm:$0xf]
    %v101 = vld [vmem:[%s95 + $0x14] sm:$0xf]
    %v102 = vld [vmem:[%s95 + $0x18] sm:$0xf]
    %v103 = vld [vmem:[%s95 + $0x1c] sm:$0xf]
    %v104 = vld [vmem:[%s95 + $0x20] sm:$0xf]
    %v114 = vunpack.c.l.b16 %v96
    %v115 = vunpack.c.l.b16 %v97
    %v116 = vunpack.c.l.b16 %v98
    %v117 = vunpack.c.l.b16 %v99
    %v118 = vunpack.c.l.b16 %v100
    %v119 = vunpack.c.l.b16 %v101
    %v120 = vunpack.c.l.b16 %v102
    %v121 = vunpack.c.l.b16 %v103
    %v122 = vunpack.c.l.b16 %v104
    %v123 = vpack.c.b16 %v115, %v114
    %v124 = vpack.c.b16 %v117, %v116
    %v125 = vpack.c.b16 %v119, %v118
    %v126 = vpack.c.b16 %v121, %v120
    %v127 = vpack.c.b16 %v122, %v122
    %vm132 = vcmask 588800
    %v134 = vsel %vm132, %v93, 0
    %v137 = vsel %vm132, %v94, 0
    %vm139 = vcmask 1043456
    %v141 = vsel %vm139, %v127, 0
    %143 = vmatprep.subr.bf16.mxu0 0
    %144 = vmatpush1.bf16.msra.mxu0 %v123
    %145 = vmatprep.subr.bf16.mxu0 0
    %146 = vmatpush1.bf16.msra.mxu0 %v124
    %147 = vmatprep.subr.bf16.mxu0 0
    %148 = vmatpush1.bf16.msra.mxu0 %v125
    %149 = vmatprep.subr.bf16.mxu0 0
    %150 = vmatpush1.bf16.msra.mxu0 %v126
    %151 = vmatprep.subr.bf16.mxu0 0
    %152 = vmatpush1.bf16.msra.mxu0 %v141
    %153 = vmatprep.subr.bf16.mxu0 0
    %154 = vmatpush1.bf16.msra.mxu0 0
    %155 = vmatprep.subr.bf16.mxu0 0
    %156 = vmatpush1.bf16.msra.mxu0 0
    %157 = vmatprep.subr.bf16.mxu0 0
    %158 = vmatpush1.bf16.msra.mxu0 0
    %159 = vmatprep.subr.bf16.mxu0 0
    %160 = vmatpush1.bf16.msra.mxu0 0
    %161 = vmatprep.subr.bf16.mxu0 0
    %162 = vmatpush1.bf16.msra.mxu0 0
    %163 = vmatprep.subr.bf16.mxu0 0
    %164 = vmatpush1.bf16.msra.mxu0 0
    %165 = vmatprep.subr.bf16.mxu0 0
    %166 = vmatpush1.bf16.msra.mxu0 0
    %167 = vmatprep.subr.bf16.mxu0 0
    %168 = vmatpush1.bf16.msra.mxu0 0
    %169 = vmatprep.subr.bf16.mxu0 0
    %170 = vmatpush1.bf16.msra.mxu0 0
    %171 = vmatprep.subr.bf16.mxu0 0
    %172 = vmatpush1.bf16.msra.mxu0 0
    %173 = vmatprep.subr.bf16.mxu0 0
    %174 = vmatpush1.bf16.msra.mxu0 0
    %175 = vmatprep.mubr.bf16.mxu0 0
    %176 = vmatmul.mubr.bf16.gmra.mrb[0].mxu0 %v134
    %v177 = vpop.f32.mrb[0].mxu0
    %v178 = vadd.f32 0.0, %v177
    %v179 = vpop.f32.mrb[0].mxu0
    %v180 = vpop.f32.mrb[0].mxu0
    %v181 = vadd.f32 0.0, %v180
    %v182 = vpop.f32.mrb[0].mxu0
    %183 = vmatprep.mubr.bf16.mxu0 0
    %184 = vmatmul.mubr.bf16.gmra.mrb[0].mxu0 %v137
    %v185 = vpop.f32.mrb[0].mxu0
    %v186 = vadd.f32 0.0, %v185
    %v187 = vpop.f32.mrb[0].mxu0
    %v188 = vpop.f32.mrb[0].mxu0
    %v189 = vadd.f32 0.0, %v188
    %v190 = vpop.f32.mrb[0].mxu0
    %191 = vdwg.mxu0
    %v201 = vunpack.c.l.b16 %v80
    %v202 = vunpack.c.l.b16 %v81
    %v203 = vunpack.c.l.b16 %v82
    %v204 = vunpack.c.l.b16 %v83
    %v205 = vunpack.c.l.b16 %v84
    %v206 = vunpack.c.l.b16 %v85
    %v207 = vunpack.c.l.b16 %v86
    %v208 = vunpack.c.l.b16 %v87
    %v209 = vunpack.c.l.b16 %v88
    %v210 = vpack.c.b16 %v202, %v201
    %v211 = vpack.c.b16 %v204, %v203
    %v212 = vpack.c.b16 %v206, %v205
    %v213 = vpack.c.b16 %v208, %v207
    %v214 = vpack.c.b16 %v209, %v209
    %v220 = vsel %vm132, %v78, 0
    %v223 = vsel %vm132, %v79, 0
    %v226 = vsel %vm139, %v214, 0
    %228 = vmatprep.subr.bf16.mxu0 0
    %229 = vmatpush1.bf16.msra.mxu0 %v210
    %230 = vmatprep.subr.bf16.mxu0 0
    %231 = vmatpush1.bf16.msra.mxu0 %v211
    %232 = vmatprep.subr.bf16.mxu0 0
    %233 = vmatpush1.bf16.msra.mxu0 %v212
    %234 = vmatprep.subr.bf16.mxu0 0
    %235 = vmatpush1.bf16.msra.mxu0 %v213
    %236 = vmatprep.subr.bf16.mxu0 0
    %237 = vmatpush1.bf16.msra.mxu0 %v226
    %238 = vmatprep.subr.bf16.mxu0 0
    %239 = vmatpush1.bf16.msra.mxu0 0
    %240 = vmatprep.subr.bf16.mxu0 0
    %241 = vmatpush1.bf16.msra.mxu0 0
    %242 = vmatprep.subr.bf16.mxu0 0
    %243 = vmatpush1.bf16.msra.mxu0 0
    %244 = vmatprep.subr.bf16.mxu0 0
    %245 = vmatpush1.bf16.msra.mxu0 0
    %246 = vmatprep.subr.bf16.mxu0 0
    %247 = vmatpush1.bf16.msra.mxu0 0
    %248 = vmatprep.subr.bf16.mxu0 0
    %249 = vmatpush1.bf16.msra.mxu0 0
    %250 = vmatprep.subr.bf16.mxu0 0
    %251 = vmatpush1.bf16.msra.mxu0 0
    %252 = vmatprep.subr.bf16.mxu0 0
    %253 = vmatpush1.bf16.msra.mxu0 0
    %254 = vmatprep.subr.bf16.mxu0 0
    %255 = vmatpush1.bf16.msra.mxu0 0
    %256 = vmatprep.subr.bf16.mxu0 0
    %257 = vmatpush1.bf16.msra.mxu0 0
    %258 = vmatprep.subr.bf16.mxu0 0
    %259 = vmatpush1.bf16.msra.mxu0 0
    %260 = vmatprep.mubr.bf16.mxu0 0
    %261 = vmatmul.mubr.bf16.gmra.mrb[0].mxu0 %v220
    %v262 = vpop.f32.mrb[0].mxu0
    %v263 = vadd.f32 %v178, %v262
    %v264 = vpop.f32.mrb[0].mxu0
    %v265 = vpop.f32.mrb[0].mxu0
    %v266 = vadd.f32 %v181, %v265
    %v267 = vpop.f32.mrb[0].mxu0
    %268 = vmatprep.mubr.bf16.mxu0 0
    %269 = vmatmul.mubr.bf16.gmra.mrb[0].mxu0 %v223
    %v270 = vpop.f32.mrb[0].mxu0
    %v271 = vadd.f32 %v186, %v270
    %v272 = vpop.f32.mrb[0].mxu0
    %v273 = vpop.f32.mrb[0].mxu0
    %v274 = vadd.f32 %v189, %v273
    %v275 = vpop.f32.mrb[0].mxu0
    %276 = vdwg.mxu0
    %v277 = vld [vmem:[#allocation2 + $0x2] sm:$0xff]
    %v278 = vld [vmem:[#allocation2 + $0xa] sm:$0xff]
    %v279 = vld [vmem:[#allocation2 + $0x1a] sm:$0xff]
    %v280 = vld [vmem:[#allocation2 + $0x22] sm:$0xff]
    %v281 = vpack.c.bf16 %v278, %v277
    %v282 = vpack.c.bf16 %v280, %v279
    %s283 = scalar_lea.vmem %s1, 72
    %v284 = vld [vmem:[%s283] sm:$0xf]
    %v285 = vld [vmem:[%s283 + $0x4] sm:$0xf]
    %v286 = vld [vmem:[%s283 + $0x8] sm:$0xf]
    %v287 = vld [vmem:[%s283 + $0xc] sm:$0xf]
    %v288 = vld [vmem:[%s283 + $0x10] sm:$0xf]
    %v289 = vld [vmem:[%s283 + $0x14] sm:$0xf]
    %v290 = vld [vmem:[%s283 + $0x18] sm:$0xf]
    %v291 = vld [vmem:[%s283 + $0x1c] sm:$0xf]
    %v292 = vld [vmem:[%s283 + $0x20] sm:$0xf]
    %v302 = vunpack.c.l.b16 %v284
    %v303 = vunpack.c.l.b16 %v285
    %v304 = vunpack.c.l.b16 %v286
    %v305 = vunpack.c.l.b16 %v287
    %v306 = vunpack.c.l.b16 %v288
    %v307 = vunpack.c.l.b16 %v289
    %v308 = vunpack.c.l.b16 %v290
    %v309 = vunpack.c.l.b16 %v291
    %v310 = vunpack.c.l.b16 %v292
    %v311 = vpack.c.b16 %v303, %v302
    %v312 = vpack.c.b16 %v305, %v304
    %v313 = vpack.c.b16 %v307, %v306
    %v314 = vpack.c.b16 %v309, %v308
    %v315 = vpack.c.b16 %v310, %v310
    %v321 = vsel %vm132, %v281, 0
    %v324 = vsel %vm132, %v282, 0
    %v327 = vsel %vm139, %v315, 0
    %329 = vmatprep.subr.bf16.mxu0 0
    %330 = vmatpush1.bf16.msra.mxu0 %v311
    %331 = vmatprep.subr.bf16.mxu0 0
    %332 = vmatpush1.bf16.msra.mxu0 %v312
    %333 = vmatprep.subr.bf16.mxu0 0
    %334 = vmatpush1.bf16.msra.mxu0 %v313
    %335 = vmatprep.subr.bf16.mxu0 0
    %336 = vmatpush1.bf16.msra.mxu0 %v314
    %337 = vmatprep.subr.bf16.mxu0 0
    %338 = vmatpush1.bf16.msra.mxu0 %v327
    %339 = vmatprep.subr.bf16.mxu0 0
    %340 = vmatpush1.bf16.msra.mxu0 0
    %341 = vmatprep.subr.bf16.mxu0 0
    %342 = vmatpush1.bf16.msra.mxu0 0
    %343 = vmatprep.subr.bf16.mxu0 0
    %344 = vmatpush1.bf16.msra.mxu0 0
    %345 = vmatprep.subr.bf16.mxu0 0
    %346 = vmatpush1.bf16.msra.mxu0 0
    %347 = vmatprep.subr.bf16.mxu0 0
    %348 = vmatpush1.bf16.msra.mxu0 0
    %349 = vmatprep.subr.bf16.mxu0 0
    %350 = vmatpush1.bf16.msra.mxu0 0
    %351 = vmatprep.subr.bf16.mxu0 0
    %352 = vmatpush1.bf16.msra.mxu0 0
    %353 = vmatprep.subr.bf16.mxu0 0
    %354 = vmatpush1.bf16.msra.mxu0 0
    %355 = vmatprep.subr.bf16.mxu0 0
    %356 = vmatpush1.bf16.msra.mxu0 0
    %357 = vmatprep.subr.bf16.mxu0 0
    %358 = vmatpush1.bf16.msra.mxu0 0
    %359 = vmatprep.subr.bf16.mxu0 0
    %360 = vmatpush1.bf16.msra.mxu0 0
    %361 = vmatprep.mubr.bf16.mxu0 0
    %362 = vmatmul.mubr.bf16.gmra.mrb[0].mxu0 %v321
    %v363 = vpop.f32.mrb[0].mxu0
    %v364 = vadd.f32 0.0, %v363
    %v365 = vpop.f32.mrb[0].mxu0
    %v366 = vpop.f32.mrb[0].mxu0
    %v367 = vadd.f32 0.0, %v366
    %v368 = vpop.f32.mrb[0].mxu0
    %369 = vmatprep.mubr.bf16.mxu0 0
    %370 = vmatmul.mubr.bf16.gmra.mrb[0].mxu0 %v324
    %v371 = vpop.f32.mrb[0].mxu0
    %v372 = vadd.f32 0.0, %v371
    %v373 = vpop.f32.mrb[0].mxu0
    %v374 = vpop.f32.mrb[0].mxu0
    %v375 = vadd.f32 0.0, %v374
    %v376 = vpop.f32.mrb[0].mxu0
    %377 = vdwg.mxu0
    %v378 = vadd.f32 %v263, %v364
    %v379 = vadd.f32 %v266, %v367
    %v380 = vadd.f32 %v271, %v372
    %v381 = vadd.f32 %v274, %v375
    %v382 = vmul.f32 %v378, %v378
    %v383 = vmul.f32 %v379, %v379
    %v384 = vmul.f32 %v380, %v380
    %v385 = vmul.f32 %v381, %v381
    %390 = vrot.lane.b32.xlu0 %v382, 64
    %v391 = vpop.permute.xlu0 %390
    %392 = vrot.lane.b32.xlu0 %v383, 64
    %v393 = vpop.permute.xlu0 %392
    %394 = vrot.lane.b32.xlu0 %v384, 64
    %v395 = vpop.permute.xlu0 %394
    %396 = vrot.lane.b32.xlu0 %v385, 64
    %v397 = vpop.permute.xlu0 %396
    %vm402 = vcmask 523264
    %v403 = vsel %vm402, %v378, %v391
    %v404 = vsel %vm402, %v379, %v393
    %v405 = vsel %vm402, %v380, %v395
    %v406 = vsel %vm402, %v381, %v397
    %v407 = vadd.f32 %v403, %v404
    %v408 = vadd.f32 %v407, %v405
    %v409 = vadd.f32 %v408, %v406
    %v410 = vrot.slane %v409, 4
    %v411 = vadd.f32 %v409, %v410
    %v412 = vrot.slane %v411, 2
    %v413 = vadd.f32 %v411, %v412
    %v414 = vrot.slane %v413, 1
    %v415 = vadd.f32 %v413, %v414
    %417 = vrot.lane.b32.xlu0 %v415, 124
    %v418 = vpop.permute.xlu0 %417
    %v420 = vadd.f32 %v415, %v418
    %421 = vrot.lane.b32.xlu0 %v415, 120
    %v422 = vpop.permute.xlu0 %421
    %v424 = vadd.f32 %v420, %v422
    %425 = vrot.lane.b32.xlu0 %v415, 116
    %v426 = vpop.permute.xlu0 %425
    %v428 = vadd.f32 %v424, %v426
    %429 = vrot.lane.b32.xlu0 %v415, 112
    %v430 = vpop.permute.xlu0 %429
    %v432 = vadd.f32 %v428, %v430
    %433 = vrot.lane.b32.xlu0 %v415, 108
    %v434 = vpop.permute.xlu0 %433
    %v436 = vadd.f32 %v432, %v434
    %437 = vrot.lane.b32.xlu0 %v415, 104
    %v438 = vpop.permute.xlu0 %437
    %v440 = vadd.f32 %v436, %v438
    %441 = vrot.lane.b32.xlu0 %v415, 100
    %v442 = vpop.permute.xlu0 %441
    %v444 = vadd.f32 %v440, %v442
    %445 = vrot.lane.b32.xlu0 %v415, 96
    %v446 = vpop.permute.xlu0 %445
    %v448 = vadd.f32 %v444, %v446
    %449 = vrot.lane.b32.xlu0 %v415, 92
    %v450 = vpop.permute.xlu0 %449
    %v452 = vadd.f32 %v448, %v450
    %453 = vrot.lane.b32.xlu0 %v415, 88
    %v454 = vpop.permute.xlu0 %453
    %v456 = vadd.f32 %v452, %v454
    %457 = vrot.lane.b32.xlu0 %v415, 84
    %v458 = vpop.permute.xlu0 %457
    %v460 = vadd.f32 %v456, %v458
    %461 = vrot.lane.b32.xlu0 %v415, 80
    %v462 = vpop.permute.xlu0 %461
    %v464 = vadd.f32 %v460, %v462
    %465 = vrot.lane.b32.xlu0 %v415, 76
    %v466 = vpop.permute.xlu0 %465
    %v468 = vadd.f32 %v464, %v466
    %469 = vrot.lane.b32.xlu0 %v415, 72
    %v470 = vpop.permute.xlu0 %469
    %v472 = vadd.f32 %v468, %v470
    %473 = vrot.lane.b32.xlu0 %v415, 68
    %v474 = vpop.permute.xlu0 %473
    %v476 = vadd.f32 %v472, %v474
    %v477 = vmul.f32 %v476, 0.001953125
    %v478 = vmul.f32 %v477, %v477
    %480 = vrot.lane.b32.xlu0 %v478, 64
    %v481 = vpop.permute.xlu0 %480
    %v483 = vsub.f32 %v477, %v481
    %v484 = vld [vmem:[%s3] sm:$0x1]
    %v485 = vadd.f32 %v483, 1e-05
    %v486 = vrsqrt.pop %v485
    %v489 = vunpack.c.l.s4 1966171168
    %v490 = vunpack.c.0.s8 %v489
    %v491 = vlaneseq
    %v492 = vshrl.u32 %v491, 7
    %v493 = vsub.s32 %v490, %v492
    %v494 = vrot.slane %v486, %v493
    %v496 = vunpack.c.l.s4 1966171168
    %v497 = vunpack.c.0.s8 %v496
    %v498 = vlaneseq
    %v499 = vshrl.u32 %v498, 7
    %v500 = vsub.s32 %v497, %v499
    %v501 = vrot.slane %v494, %v500
    %502 = vrot.lane.b32.xlu0 %v501, 64
    %v503 = vpop.permute.xlu0 %502
    %v505 = vmul.f32 %v484, %v503
    %v506 = vld [vmem:[%s4] sm:$0x1]
    %v507 = vmul.f32 %v477, %v505
    %v508 = vsub.f32 %v506, %v507
    %v510 = vlaneseq
    %v511 = vshrl.u32 %v510, 7
    %v512 = vsub.s32 0, %v511
    %v513 = vrot.slane %v505, %v512
    %514 = vrot.lane.b32.xlu0 %v513, 4
    %v515 = vpop.permute.xlu0 %514
    %517 = vrot.lane.b32.xlu0 %v513, 8
    %v518 = vpop.permute.xlu0 %517
    %520 = vrot.lane.b32.xlu0 %v513, 12
    %v521 = vpop.permute.xlu0 %520
    %523 = vrot.lane.b32.xlu0 %v513, 16
    %v524 = vpop.permute.xlu0 %523
    %526 = vrot.lane.b32.xlu0 %v513, 20
    %v527 = vpop.permute.xlu0 %526
    %529 = vrot.lane.b32.xlu0 %v513, 24
    %v530 = vpop.permute.xlu0 %529
    %532 = vrot.lane.b32.xlu0 %v513, 28
    %v533 = vpop.permute.xlu0 %532
    %535 = vrot.lane.b32.xlu0 %v513, 32
    %v536 = vpop.permute.xlu0 %535
    %538 = vrot.lane.b32.xlu0 %v513, 36
    %v539 = vpop.permute.xlu0 %538
    %541 = vrot.lane.b32.xlu0 %v513, 40
    %v542 = vpop.permute.xlu0 %541
    %544 = vrot.lane.b32.xlu0 %v513, 44
    %v545 = vpop.permute.xlu0 %544
    %547 = vrot.lane.b32.xlu0 %v513, 48
    %v548 = vpop.permute.xlu0 %547
    %550 = vrot.lane.b32.xlu0 %v513, 52
    %v551 = vpop.permute.xlu0 %550
    %553 = vrot.lane.b32.xlu0 %v513, 56
    %v554 = vpop.permute.xlu0 %553
    %556 = vrot.lane.b32.xlu0 %v513, 60
    %v557 = vpop.permute.xlu0 %556
    %v559 = vsel %vm37, %v505, %v515
    %vm560 = vcmask 64512
    %v561 = vsel %vm560, %v559, %v518
    %vm562 = vcmask 97280
    %v563 = vsel %vm562, %v561, %v521
    %vm564 = vcmask 130048
    %v565 = vsel %vm564, %v563, %v524
    %vm566 = vcmask 162816
    %v567 = vsel %vm566, %v565, %v527
    %vm568 = vcmask 195584
    %v569 = vsel %vm568, %v567, %v530
    %vm570 = vcmask 228352
    %v571 = vsel %vm570, %v569, %v533
    %vm572 = vcmask 261120
    %v573 = vsel %vm572, %v571, %v536
    %vm574 = vcmask 293888
    %v575 = vsel %vm574, %v573, %v539
    %vm576 = vcmask 326656
    %v577 = vsel %vm576, %v575, %v542
    %vm578 = vcmask 359424
    %v579 = vsel %vm578, %v577, %v545
    %vm580 = vcmask 392192
    %v581 = vsel %vm580, %v579, %v548
    %vm582 = vcmask 424960
    %v583 = vsel %vm582, %v581, %v551
    %vm584 = vcmask 457728
    %v585 = vsel %vm584, %v583, %v554
    %vm586 = vcmask 490496
    %v587 = vsel %vm586, %v585, %v557
    %v589 = vlaneseq
    %v590 = vshrl.u32 %v589, 7
    %v591 = vsub.s32 0, %v590
    %v592 = vrot.slane %v508, %v591
    %593 = vrot.lane.b32.xlu0 %v592, 4
    %v594 = vpop.permute.xlu0 %593
    %596 = vrot.lane.b32.xlu0 %v592, 8
    %v597 = vpop.permute.xlu0 %596
    %599 = vrot.lane.b32.xlu0 %v592, 12
    %v600 = vpop.permute.xlu0 %599
    %602 = vrot.lane.b32.xlu0 %v592, 16
    %v603 = vpop.permute.xlu0 %602
    %605 = vrot.lane.b32.xlu0 %v592, 20
    %v606 = vpop.permute.xlu0 %605
    %608 = vrot.lane.b32.xlu0 %v592, 24
    %v609 = vpop.permute.xlu0 %608
    %611 = vrot.lane.b32.xlu0 %v592, 28
    %v612 = vpop.permute.xlu0 %611
    %614 = vrot.lane.b32.xlu0 %v592, 32
    %v615 = vpop.permute.xlu0 %614
    %617 = vrot.lane.b32.xlu0 %v592, 36
    %v618 = vpop.permute.xlu0 %617
    %620 = vrot.lane.b32.xlu0 %v592, 40
    %v621 = vpop.permute.xlu0 %620
    %623 = vrot.lane.b32.xlu0 %v592, 44
    %v624 = vpop.permute.xlu0 %623
    %626 = vrot.lane.b32.xlu0 %v592, 48
    %v627 = vpop.permute.xlu0 %626
    %629 = vrot.lane.b32.xlu0 %v592, 52
    %v630 = vpop.permute.xlu0 %629
    %632 = vrot.lane.b32.xlu0 %v592, 56
    %v633 = vpop.permute.xlu0 %632
    %635 = vrot.lane.b32.xlu0 %v592, 60
    %v636 = vpop.permute.xlu0 %635
    %v638 = vsel %vm37, %v508, %v594
    %v639 = vsel %vm560, %v638, %v597
    %v640 = vsel %vm562, %v639, %v600
    %v641 = vsel %vm564, %v640, %v603
    %v642 = vsel %vm566, %v641, %v606
    %v643 = vsel %vm568, %v642, %v609
    %v644 = vsel %vm570, %v643, %v612
    %v645 = vsel %vm572, %v644, %v615
    %v646 = vsel %vm574, %v645, %v618
    %v647 = vsel %vm576, %v646, %v621
    %v648 = vsel %vm578, %v647, %v624
    %v649 = vsel %vm580, %v648, %v627
    %v650 = vsel %vm582, %v649, %v630
    %v651 = vsel %vm584, %v650, %v633
    %v652 = vsel %vm586, %v651, %v636
    %v653 = vlaneseq
    %v654 = vshrl.u32 %v653, 7
    %v655 = vsub.s32 0, %v654
    %v656 = vrot.slane %v587, %v655
    %v657 = vmul.f32 %v378, %v656
    %v658 = vmul.f32 %v379, %v656
    %v659 = vmul.f32 %v380, %v656
    %v660 = vmul.f32 %v381, %v656
    %v661 = vlaneseq
    %v662 = vshrl.u32 %v661, 7
    %v663 = vsub.s32 0, %v662
    %v664 = vrot.slane %v652, %v663
    %v665 = vadd.f32 %v657, %v664
    %v666 = vadd.f32 %v658, %v664
    %v667 = vadd.f32 %v659, %v664
    %v668 = vadd.f32 %v660, %v664
    %v669 = vmax.f32 %v665, 0.0
    %v670 = vmax.f32 %v666, 0.0
    %v671 = vmax.f32 %v667, 0.0
    %v672 = vmax.f32 %v668, 0.0
    %673 = vst.msk [vmem:[#allocation3] sm:$0x1] %vm32, 0.0
    %674 = vst.msk [vmem:[#allocation3 + $0x18] sm:$0x1] %vm32, 0.0
    %675 = vst.msk [vmem:[#allocation3 + $0x11] sm:$0x1] %vm32, 0.0
    %676 = vst.msk [vmem:[#allocation3 + $0x29] sm:$0x1] %vm32, 0.0
    %677 = vst.msk [vmem:[#allocation3] sm:$0xff] %vm37, 0.0
    %678 = vst.msk [vmem:[#allocation3 + $0x8] sm:$0xff] %vm37, 0.0
    %679 = vst.msk [vmem:[#allocation3 + $0x10] sm:$0x3] %vm40, 0.0
    %680 = vst.msk [vmem:[#allocation3 + $0x18] sm:$0xff] %vm37, 0.0
    %681 = vst.msk [vmem:[#allocation3 + $0x20] sm:$0xff] %vm37, 0.0
    %682 = vst.msk [vmem:[#allocation3 + $0x28] sm:$0x3] %vm40, 0.0
    %683 = vst.msk [vmem:[#allocation3] sm:$0xff] %vm45, 0.0
    %684 = vst.msk [vmem:[#allocation3 + $0x8] sm:$0xff] %vm45, 0.0
    %685 = vst.msk [vmem:[#allocation3 + $0x10] sm:$0x3] %vm48, 0.0
    %686 = vst.msk [vmem:[#allocation3 + $0x18] sm:$0xff] %vm45, 0.0
    %687 = vst.msk [vmem:[#allocation3 + $0x20] sm:$0xff] %vm45, 0.0
    %688 = vst.msk [vmem:[#allocation3 + $0x28] sm:$0x3] %vm48, 0.0
    %693 = vrot.lane.b32.xlu0 %v669, 4
    %v694 = vpop.permute.xlu0 %693
    %695 = vrot.lane.b32.xlu0 %v670, 4
    %v696 = vpop.permute.xlu0 %695
    %697 = vrot.lane.b32.xlu0 %v671, 4
    %v698 = vpop.permute.xlu0 %697
    %699 = vrot.lane.b32.xlu0 %v672, 4
    %v700 = vpop.permute.xlu0 %699
    %705 = vst.msk [vmem:[#allocation3 + $0x1] sm:$0xff] %vm69, %v694
    %706 = vst.msk [vmem:[#allocation3 + $0x9] sm:$0xff] %vm69, %v696
    %707 = vst.msk [vmem:[#allocation3 + $0x19] sm:$0xff] %vm69, %v698
    %708 = vst.msk [vmem:[#allocation3 + $0x21] sm:$0xff] %vm69, %v700
    %v709 = vld [vmem:[#allocation3] sm:$0xff]
    %v710 = vld [vmem:[#allocation3 + $0x8] sm:$0xff]
    %v711 = vld [vmem:[#allocation3 + $0x18] sm:$0xff]
    %v712 = vld [vmem:[#allocation3 + $0x20] sm:$0xff]
    %v713 = vpack.c.bf16 %v710, %v709
    %v714 = vpack.c.bf16 %v712, %v711
    %v715 = vld [vmem:[%s2] sm:$0xf]
    %v716 = vld [vmem:[%s2 + $0x4] sm:$0xf]
    %v717 = vld [vmem:[%s2 + $0x8] sm:$0xf]
    %v718 = vld [vmem:[%s2 + $0xc] sm:$0xf]
    %v719 = vld [vmem:[%s2 + $0x10] sm:$0xf]
    %v720 = vld [vmem:[%s2 + $0x14] sm:$0xf]
    %v721 = vld [vmem:[%s2 + $0x18] sm:$0xf]
    %v722 = vld [vmem:[%s2 + $0x1c] sm:$0xf]
    %v723 = vld [vmem:[%s2 + $0x20] sm:$0xf]
    %v724 = vld [vmem:[#allocation3 + $0x1] sm:$0xff]
    %v725 = vld [vmem:[#allocation3 + $0x9] sm:$0xff]
    %v726 = vld [vmem:[#allocation3 + $0x19] sm:$0xff]
    %v727 = vld [vmem:[#allocation3 + $0x21] sm:$0xff]
    %v728 = vpack.c.bf16 %v725, %v724
    %v729 = vpack.c.bf16 %v727, %v726
    %s730 = scalar_lea.vmem %s2, 36
    %v731 = vld [vmem:[%s730] sm:$0xf]
    %v732 = vld [vmem:[%s730 + $0x4] sm:$0xf]
    %v733 = vld [vmem:[%s730 + $0x8] sm:$0xf]
    %v734 = vld [vmem:[%s730 + $0xc] sm:$0xf]
    %v735 = vld [vmem:[%s730 + $0x10] sm:$0xf]
    %v736 = vld [vmem:[%s730 + $0x14] sm:$0xf]
    %v737 = vld [vmem:[%s730 + $0x18] sm:$0xf]
    %v738 = vld [vmem:[%s730 + $0x1c] sm:$0xf]
    %v739 = vld [vmem:[%s730 + $0x20] sm:$0xf]
    %v749 = vunpack.c.l.b16 %v731
    %v750 = vunpack.c.l.b16 %v732
    %v751 = vunpack.c.l.b16 %v733
    %v752 = vunpack.c.l.b16 %v734
    %v753 = vunpack.c.l.b16 %v735
    %v754 = vunpack.c.l.b16 %v736
    %v755 = vunpack.c.l.b16 %v737
    %v756 = vunpack.c.l.b16 %v738
    %v757 = vunpack.c.l.b16 %v739
    %v758 = vpack.c.b16 %v750, %v749
    %v759 = vpack.c.b16 %v752, %v751
    %v760 = vpack.c.b16 %v754, %v753
    %v761 = vpack.c.b16 %v756, %v755
    %v762 = vpack.c.b16 %v757, %v757
    %v768 = vsel %vm132, %v728, 0
    %v771 = vsel %vm132, %v729, 0
    %v774 = vsel %vm139, %v762, 0
    %776 = vmatprep.subr.bf16.mxu0 0
    %777 = vmatpush1.bf16.msra.mxu0 %v758
    %778 = vmatprep.subr.bf16.mxu0 0
    %779 = vmatpush1.bf16.msra.mxu0 %v759
    %780 = vmatprep.subr.bf16.mxu0 0
    %781 = vmatpush1.bf16.msra.mxu0 %v760
    %782 = vmatprep.subr.bf16.mxu0 0
    %783 = vmatpush1.bf16.msra.mxu0 %v761
    %784 = vmatprep.subr.bf16.mxu0 0
    %785 = vmatpush1.bf16.msra.mxu0 %v774
    %786 = vmatprep.subr.bf16.mxu0 0
    %787 = vmatpush1.bf16.msra.mxu0 0
    %788 = vmatprep.subr.bf16.mxu0 0
    %789 = vmatpush1.bf16.msra.mxu0 0
    %790 = vmatprep.subr.bf16.mxu0 0
    %791 = vmatpush1.bf16.msra.mxu0 0
    %792 = vmatprep.subr.bf16.mxu0 0
    %793 = vmatpush1.bf16.msra.mxu0 0
    %794 = vmatprep.subr.bf16.mxu0 0
    %795 = vmatpush1.bf16.msra.mxu0 0
    %796 = vmatprep.subr.bf16.mxu0 0
    %797 = vmatpush1.bf16.msra.mxu0 0
    %798 = vmatprep.subr.bf16.mxu0 0
    %799 = vmatpush1.bf16.msra.mxu0 0
    %800 = vmatprep.subr.bf16.mxu0 0
    %801 = vmatpush1.bf16.msra.mxu0 0
    %802 = vmatprep.subr.bf16.mxu0 0
    %803 = vmatpush1.bf16.msra.mxu0 0
    %804 = vmatprep.subr.bf16.mxu0 0
    %805 = vmatpush1.bf16.msra.mxu0 0
    %806 = vmatprep.subr.bf16.mxu0 0
    %807 = vmatpush1.bf16.msra.mxu0 0
    %808 = vmatprep.mubr.bf16.mxu0 0
    %809 = vmatmul.mubr.bf16.gmra.mrb[0].mxu0 %v768
    %v810 = vpop.f32.mrb[0].mxu0
    %v811 = vadd.f32 0.0, %v810
    %v812 = vpop.f32.mrb[0].mxu0
    %v813 = vpop.f32.mrb[0].mxu0
    %v814 = vadd.f32 0.0, %v813
    %v815 = vpop.f32.mrb[0].mxu0
    %816 = vmatprep.mubr.bf16.mxu0 0
    %817 = vmatmul.mubr.bf16.gmra.mrb[0].mxu0 %v771
    %v818 = vpop.f32.mrb[0].mxu0
    %v819 = vadd.f32 0.0, %v818
    %v820 = vpop.f32.mrb[0].mxu0
    %v821 = vpop.f32.mrb[0].mxu0
    %v822 = vadd.f32 0.0, %v821
    %v823 = vpop.f32.mrb[0].mxu0
    %824 = vdwg.mxu0
    %v834 = vunpack.c.l.b16 %v715
    %v835 = vunpack.c.l.b16 %v716
    %v836 = vunpack.c.l.b16 %v717
    %v837 = vunpack.c.l.b16 %v718
    %v838 = vunpack.c.l.b16 %v719
    %v839 = vunpack.c.l.b16 %v720
    %v840 = vunpack.c.l.b16 %v721
    %v841 = vunpack.c.l.b16 %v722
    %v842 = vunpack.c.l.b16 %v723
    %v843 = vpack.c.b16 %v835, %v834
    %v844 = vpack.c.b16 %v837, %v836
    %v845 = vpack.c.b16 %v839, %v838
    %v846 = vpack.c.b16 %v841, %v840
    %v847 = vpack.c.b16 %v842, %v842
    %v853 = vsel %vm132, %v713, 0
    %v856 = vsel %vm132, %v714, 0
    %v859 = vsel %vm139, %v847, 0
    %861 = vmatprep.subr.bf16.mxu0 0
    %862 = vmatpush1.bf16.msra.mxu0 %v843
    %863 = vmatprep.subr.bf16.mxu0 0
    %864 = vmatpush1.bf16.msra.mxu0 %v844
    %865 = vmatprep.subr.bf16.mxu0 0
    %866 = vmatpush1.bf16.msra.mxu0 %v845
    %867 = vmatprep.subr.bf16.mxu0 0
    %868 = vmatpush1.bf16.msra.mxu0 %v846
    %869 = vmatprep.subr.bf16.mxu0 0
    %870 = vmatpush1.bf16.msra.mxu0 %v859
    %871 = vmatprep.subr.bf16.mxu0 0
    %872 = vmatpush1.bf16.msra.mxu0 0
    %873 = vmatprep.subr.bf16.mxu0 0
    %874 = vmatpush1.bf16.msra.mxu0 0
    %875 = vmatprep.subr.bf16.mxu0 0
    %876 = vmatpush1.bf16.msra.mxu0 0
    %877 = vmatprep.subr.bf16.mxu0 0
    %878 = vmatpush1.bf16.msra.mxu0 0
    %879 = vmatprep.subr.bf16.mxu0 0
    %880 = vmatpush1.bf16.msra.mxu0 0
    %881 = vmatprep.subr.bf16.mxu0 0
    %882 = vmatpush1.bf16.msra.mxu0 0
    %883 = vmatprep.subr.bf16.mxu0 0
    %884 = vmatpush1.bf16.msra.mxu0 0
    %885 = vmatprep.subr.bf16.mxu0 0
    %886 = vmatpush1.bf16.msra.mxu0 0
    %887 = vmatprep.subr.bf16.mxu0 0
    %888 = vmatpush1.bf16.msra.mxu0 0
    %889 = vmatprep.subr.bf16.mxu0 0
    %890 = vmatpush1.bf16.msra.mxu0 0
    %891 = vmatprep.subr.bf16.mxu0 0
    %892 = vmatpush1.bf16.msra.mxu0 0
    %893 = vmatprep.mubr.bf16.mxu0 0
    %894 = vmatmul.mubr.bf16.gmra.mrb[0].mxu0 %v853
    %v895 = vpop.f32.mrb[0].mxu0
    %v896 = vadd.f32 %v811, %v895
    %v897 = vpop.f32.mrb[0].mxu0
    %v898 = vpop.f32.mrb[0].mxu0
    %v899 = vadd.f32 %v814, %v898
    %v900 = vpop.f32.mrb[0].mxu0
    %901 = vmatprep.mubr.bf16.mxu0 0
    %902 = vmatmul.mubr.bf16.gmra.mrb[0].mxu0 %v856
    %v903 = vpop.f32.mrb[0].mxu0
    %v904 = vadd.f32 %v819, %v903
    %v905 = vpop.f32.mrb[0].mxu0
    %v906 = vpop.f32.mrb[0].mxu0
    %v907 = vadd.f32 %v822, %v906
    %v908 = vpop.f32.mrb[0].mxu0
    %909 = vdwg.mxu0
    %v910 = vld [vmem:[#allocation3 + $0x2] sm:$0xff]
    %v911 = vld [vmem:[#allocation3 + $0xa] sm:$0xff]
    %v912 = vld [vmem:[#allocation3 + $0x1a] sm:$0xff]
    %v913 = vld [vmem:[#allocation3 + $0x22] sm:$0xff]
    %v914 = vpack.c.bf16 %v911, %v910
    %v915 = vpack.c.bf16 %v913, %v912
    %s916 = scalar_lea.vmem %s2, 72
    %v917 = vld [vmem:[%s916] sm:$0xf]
    %v918 = vld [vmem:[%s916 + $0x4] sm:$0xf]
    %v919 = vld [vmem:[%s916 + $0x8] sm:$0xf]
    %v920 = vld [vmem:[%s916 + $0xc] sm:$0xf]
    %v921 = vld [vmem:[%s916 + $0x10] sm:$0xf]
    %v922 = vld [vmem:[%s916 + $0x14] sm:$0xf]
    %v923 = vld [vmem:[%s916 + $0x18] sm:$0xf]
    %v924 = vld [vmem:[%s916 + $0x1c] sm:$0xf]
    %v925 = vld [vmem:[%s916 + $0x20] sm:$0xf]
    %v935 = vunpack.c.l.b16 %v917
    %v936 = vunpack.c.l.b16 %v918
    %v937 = vunpack.c.l.b16 %v919
    %v938 = vunpack.c.l.b16 %v920
    %v939 = vunpack.c.l.b16 %v921
    %v940 = vunpack.c.l.b16 %v922
    %v941 = vunpack.c.l.b16 %v923
    %v942 = vunpack.c.l.b16 %v924
    %v943 = vunpack.c.l.b16 %v925
    %v944 = vpack.c.b16 %v936, %v935
    %v945 = vpack.c.b16 %v938, %v937
    %v946 = vpack.c.b16 %v940, %v939
    %v947 = vpack.c.b16 %v942, %v941
    %v948 = vpack.c.b16 %v943, %v943
    %v954 = vsel %vm132, %v914, 0
    %v957 = vsel %vm132, %v915, 0
    %v960 = vsel %vm139, %v948, 0
    %962 = vmatprep.subr.bf16.mxu0 0
    %963 = vmatpush1.bf16.msra.mxu0 %v944
    %964 = vmatprep.subr.bf16.mxu0 0
    %965 = vmatpush1.bf16.msra.mxu0 %v945
    %966 = vmatprep.subr.bf16.mxu0 0
    %967 = vmatpush1.bf16.msra.mxu0 %v946
    %968 = vmatprep.subr.bf16.mxu0 0
    %969 = vmatpush1.bf16.msra.mxu0 %v947
    %970 = vmatprep.subr.bf16.mxu0 0
    %971 = vmatpush1.bf16.msra.mxu0 %v960
    %972 = vmatprep.subr.bf16.mxu0 0
    %973 = vmatpush1.bf16.msra.mxu0 0
    %974 = vmatprep.subr.bf16.mxu0 0
    %975 = vmatpush1.bf16.msra.mxu0 0
    %976 = vmatprep.subr.bf16.mxu0 0
    %977 = vmatpush1.bf16.msra.mxu0 0
    %978 = vmatprep.subr.bf16.mxu0 0
    %979 = vmatpush1.bf16.msra.mxu0 0
    %980 = vmatprep.subr.bf16.mxu0 0
    %981 = vmatpush1.bf16.msra.mxu0 0
    %982 = vmatprep.subr.bf16.mxu0 0
    %983 = vmatpush1.bf16.msra.mxu0 0
    %984 = vmatprep.subr.bf16.mxu0 0
    %985 = vmatpush1.bf16.msra.mxu0 0
    %986 = vmatprep.subr.bf16.mxu0 0
    %987 = vmatpush1.bf16.msra.mxu0 0
    %988 = vmatprep.subr.bf16.mxu0 0
    %989 = vmatpush1.bf16.msra.mxu0 0
    %990 = vmatprep.subr.bf16.mxu0 0
    %991 = vmatpush1.bf16.msra.mxu0 0
    %992 = vmatprep.subr.bf16.mxu0 0
    %993 = vmatpush1.bf16.msra.mxu0 0
    %994 = vmatprep.mubr.bf16.mxu0 0
    %995 = vmatmul.mubr.bf16.gmra.mrb[0].mxu0 %v954
    %v996 = vpop.f32.mrb[0].mxu0
    %v997 = vadd.f32 0.0, %v996
    %v998 = vpop.f32.mrb[0].mxu0
    %v999 = vpop.f32.mrb[0].mxu0
    %v1000 = vadd.f32 0.0, %v999
    %v1001 = vpop.f32.mrb[0].mxu0
    %1002 = vmatprep.mubr.bf16.mxu0 0
    %1003 = vmatmul.mubr.bf16.gmra.mrb[0].mxu0 %v957
    %v1004 = vpop.f32.mrb[0].mxu0
    %v1005 = vadd.f32 0.0, %v1004
    %v1006 = vpop.f32.mrb[0].mxu0
    %v1007 = vpop.f32.mrb[0].mxu0
    %v1008 = vadd.f32 0.0, %v1007
    %v1009 = vpop.f32.mrb[0].mxu0
    %1010 = vdwg.mxu0
    %v1011 = vadd.f32 %v896, %v997
    %v1012 = vadd.f32 %v899, %v1000
    %v1013 = vadd.f32 %v904, %v1005
    %v1014 = vadd.f32 %v907, %v1008
    %v1015 = vmul.f32 %v1011, %v1011
    %v1016 = vmul.f32 %v1012, %v1012
    %v1017 = vmul.f32 %v1013, %v1013
    %v1018 = vmul.f32 %v1014, %v1014
    %1023 = vrot.lane.b32.xlu0 %v1015, 64
    %v1024 = vpop.permute.xlu0 %1023
    %1025 = vrot.lane.b32.xlu0 %v1016, 64
    %v1026 = vpop.permute.xlu0 %1025
    %1027 = vrot.lane.b32.xlu0 %v1017, 64
    %v1028 = vpop.permute.xlu0 %1027
    %1029 = vrot.lane.b32.xlu0 %v1018, 64
    %v1030 = vpop.permute.xlu0 %1029
    %v1035 = vsel %vm402, %v1011, %v1024
    %v1036 = vsel %vm402, %v1012, %v1026
    %v1037 = vsel %vm402, %v1013, %v1028
    %v1038 = vsel %vm402, %v1014, %v1030
    %v1039 = vadd.f32 %v1035, %v1036
    %v1040 = vadd.f32 %v1039, %v1037
    %v1041 = vadd.f32 %v1040, %v1038
    %v1042 = vrot.slane %v1041, 4
    %v1043 = vadd.f32 %v1041, %v1042
    %v1044 = vrot.slane %v1043, 2
    %v1045 = vadd.f32 %v1043, %v1044
    %v1046 = vrot.slane %v1045, 1
    %v1047 = vadd.f32 %v1045, %v1046
    %1049 = vrot.lane.b32.xlu0 %v1047, 124
    %v1050 = vpop.permute.xlu0 %1049
    %v1052 = vadd.f32 %v1047, %v1050
    %1053 = vrot.lane.b32.xlu0 %v1047, 120
    %v1054 = vpop.permute.xlu0 %1053
    %v1056 = vadd.f32 %v1052, %v1054
    %1057 = vrot.lane.b32.xlu0 %v1047, 116
    %v1058 = vpop.permute.xlu0 %1057
    %v1060 = vadd.f32 %v1056, %v1058
    %1061 = vrot.lane.b32.xlu0 %v1047, 112
    %v1062 = vpop.permute.xlu0 %1061
    %v1064 = vadd.f32 %v1060, %v1062
    %1065 = vrot.lane.b32.xlu0 %v1047, 108
    %v1066 = vpop.permute.xlu0 %1065
    %v1068 = vadd.f32 %v1064, %v1066
    %1069 = vrot.lane.b32.xlu0 %v1047, 104
    %v1070 = vpop.permute.xlu0 %1069
    %v1072 = vadd.f32 %v1068, %v1070
    %1073 = vrot.lane.b32.xlu0 %v1047, 100
    %v1074 = vpop.permute.xlu0 %1073
    %v1076 = vadd.f32 %v1072, %v1074
    %1077 = vrot.lane.b32.xlu0 %v1047, 96
    %v1078 = vpop.permute.xlu0 %1077
    %v1080 = vadd.f32 %v1076, %v1078
    %1081 = vrot.lane.b32.xlu0 %v1047, 92
    %v1082 = vpop.permute.xlu0 %1081
    %v1084 = vadd.f32 %v1080, %v1082
    %1085 = vrot.lane.b32.xlu0 %v1047, 88
    %v1086 = vpop.permute.xlu0 %1085
    %v1088 = vadd.f32 %v1084, %v1086
    %1089 = vrot.lane.b32.xlu0 %v1047, 84
    %v1090 = vpop.permute.xlu0 %1089
    %v1092 = vadd.f32 %v1088, %v1090
    %1093 = vrot.lane.b32.xlu0 %v1047, 80
    %v1094 = vpop.permute.xlu0 %1093
    %v1096 = vadd.f32 %v1092, %v1094
    %1097 = vrot.lane.b32.xlu0 %v1047, 76
    %v1098 = vpop.permute.xlu0 %1097
    %v1100 = vadd.f32 %v1096, %v1098
    %1101 = vrot.lane.b32.xlu0 %v1047, 72
    %v1102 = vpop.permute.xlu0 %1101
    %v1104 = vadd.f32 %v1100, %v1102
    %1105 = vrot.lane.b32.xlu0 %v1047, 68
    %v1106 = vpop.permute.xlu0 %1105
    %v1108 = vadd.f32 %v1104, %v1106
    %v1109 = vmul.f32 %v1108, 0.001953125
    %v1110 = vmul.f32 %v1109, %v1109
    %1112 = vrot.lane.b32.xlu0 %v1110, 64
    %v1113 = vpop.permute.xlu0 %1112
    %v1115 = vsub.f32 %v1109, %v1113
    %v1116 = vld [vmem:[%s5] sm:$0x1]
    %v1117 = vadd.f32 %v1115, 1e-05
    %v1118 = vrsqrt.pop %v1117
    %v1121 = vunpack.c.l.s4 1966171168
    %v1122 = vunpack.c.0.s8 %v1121
    %v1123 = vlaneseq
    %v1124 = vshrl.u32 %v1123, 7
    %v1125 = vsub.s32 %v1122, %v1124
    %v1126 = vrot.slane %v1118, %v1125
    %v1128 = vunpack.c.l.s4 1966171168
    %v1129 = vunpack.c.0.s8 %v1128
    %v1130 = vlaneseq
    %v1131 = vshrl.u32 %v1130, 7
    %v1132 = vsub.s32 %v1129, %v1131
    %v1133 = vrot.slane %v1126, %v1132
    %1134 = vrot.lane.b32.xlu0 %v1133, 64
    %v1135 = vpop.permute.xlu0 %1134
    %v1137 = vmul.f32 %v1116, %v1135
    %v1138 = vld [vmem:[%s6] sm:$0x1]
    %v1139 = vmul.f32 %v1109, %v1137
    %v1140 = vsub.f32 %v1138, %v1139
    %v1142 = vlaneseq
    %v1143 = vshrl.u32 %v1142, 7
    %v1144 = vsub.s32 0, %v1143
    %v1145 = vrot.slane %v1137, %v1144
    %1146 = vrot.lane.b32.xlu0 %v1145, 4
    %v1147 = vpop.permute.xlu0 %1146
    %1149 = vrot.lane.b32.xlu0 %v1145, 8
    %v1150 = vpop.permute.xlu0 %1149
    %1152 = vrot.lane.b32.xlu0 %v1145, 12
    %v1153 = vpop.permute.xlu0 %1152
    %1155 = vrot.lane.b32.xlu0 %v1145, 16
    %v1156 = vpop.permute.xlu0 %1155
    %1158 = vrot.lane.b32.xlu0 %v1145, 20
    %v1159 = vpop.permute.xlu0 %1158
    %1161 = vrot.lane.b32.xlu0 %v1145, 24
    %v1162 = vpop.permute.xlu0 %1161
    %1164 = vrot.lane.b32.xlu0 %v1145, 28
    %v1165 = vpop.permute.xlu0 %1164
    %1167 = vrot.lane.b32.xlu0 %v1145, 32
    %v1168 = vpop.permute.xlu0 %1167
    %1170 = vrot.lane.b32.xlu0 %v1145, 36
    %v1171 = vpop.permute.xlu0 %1170
    %1173 = vrot.lane.b32.xlu0 %v1145, 40
    %v1174 = vpop.permute.xlu0 %1173
    %1176 = vrot.lane.b32.xlu0 %v1145, 44
    %v1177 = vpop.permute.xlu0 %1176
    %1179 = vrot.lane.b32.xlu0 %v1145, 48
    %v1180 = vpop.permute.xlu0 %1179
    %1182 = vrot.lane.b32.xlu0 %v1145, 52
    %v1183 = vpop.permute.xlu0 %1182
    %1185 = vrot.lane.b32.xlu0 %v1145, 56
    %v1186 = vpop.permute.xlu0 %1185
    %1188 = vrot.lane.b32.xlu0 %v1145, 60
    %v1189 = vpop.permute.xlu0 %1188
    %v1191 = vsel %vm37, %v1137, %v1147
    %v1192 = vsel %vm560, %v1191, %v1150
    %v1193 = vsel %vm562, %v1192, %v1153
    %v1194 = vsel %vm564, %v1193, %v1156
    %v1195 = vsel %vm566, %v1194, %v1159
    %v1196 = vsel %vm568, %v1195, %v1162
    %v1197 = vsel %vm570, %v1196, %v1165
    %v1198 = vsel %vm572, %v1197, %v1168
    %v1199 = vsel %vm574, %v1198, %v1171
    %v1200 = vsel %vm576, %v1199, %v1174
    %v1201 = vsel %vm578, %v1200, %v1177
    %v1202 = vsel %vm580, %v1201, %v1180
    %v1203 = vsel %vm582, %v1202, %v1183
    %v1204 = vsel %vm584, %v1203, %v1186
    %v1205 = vsel %vm586, %v1204, %v1189
    %v1207 = vlaneseq
    %v1208 = vshrl.u32 %v1207, 7
    %v1209 = vsub.s32 0, %v1208
    %v1210 = vrot.slane %v1140, %v1209
    %1211 = vrot.lane.b32.xlu0 %v1210, 4
    %v1212 = vpop.permute.xlu0 %1211
    %1214 = vrot.lane.b32.xlu0 %v1210, 8
    %v1215 = vpop.permute.xlu0 %1214
    %1217 = vrot.lane.b32.xlu0 %v1210, 12
    %v1218 = vpop.permute.xlu0 %1217
    %1220 = vrot.lane.b32.xlu0 %v1210, 16
    %v1221 = vpop.permute.xlu0 %1220
    %1223 = vrot.lane.b32.xlu0 %v1210, 20
    %v1224 = vpop.permute.xlu0 %1223
    %1226 = vrot.lane.b32.xlu0 %v1210, 24
    %v1227 = vpop.permute.xlu0 %1226
    %1229 = vrot.lane.b32.xlu0 %v1210, 28
    %v1230 = vpop.permute.xlu0 %1229
    %1232 = vrot.lane.b32.xlu0 %v1210, 32
    %v1233 = vpop.permute.xlu0 %1232
    %1235 = vrot.lane.b32.xlu0 %v1210, 36
    %v1236 = vpop.permute.xlu0 %1235
    %1238 = vrot.lane.b32.xlu0 %v1210, 40
    %v1239 = vpop.permute.xlu0 %1238
    %1241 = vrot.lane.b32.xlu0 %v1210, 44
    %v1242 = vpop.permute.xlu0 %1241
    %1244 = vrot.lane.b32.xlu0 %v1210, 48
    %v1245 = vpop.permute.xlu0 %1244
    %1247 = vrot.lane.b32.xlu0 %v1210, 52
    %v1248 = vpop.permute.xlu0 %1247
    %1250 = vrot.lane.b32.xlu0 %v1210, 56
    %v1251 = vpop.permute.xlu0 %1250
    %1253 = vrot.lane.b32.xlu0 %v1210, 60
    %v1254 = vpop.permute.xlu0 %1253
    %v1256 = vsel %vm37, %v1140, %v1212
    %v1257 = vsel %vm560, %v1256, %v1215
    %v1258 = vsel %vm562, %v1257, %v1218
    %v1259 = vsel %vm564, %v1258, %v1221
    %v1260 = vsel %vm566, %v1259, %v1224
    %v1261 = vsel %vm568, %v1260, %v1227
    %v1262 = vsel %vm570, %v1261, %v1230
    %v1263 = vsel %vm572, %v1262, %v1233
    %v1264 = vsel %vm574, %v1263, %v1236
    %v1265 = vsel %vm576, %v1264, %v1239
    %v1266 = vsel %vm578, %v1265, %v1242
    %v1267 = vsel %vm580, %v1266, %v1245
    %v1268 = vsel %vm582, %v1267, %v1248
    %v1269 = vsel %vm584, %v1268, %v1251
    %v1270 = vsel %vm586, %v1269, %v1254
    %v1271 = vlaneseq
    %v1272 = vshrl.u32 %v1271, 7
    %v1273 = vsub.s32 0, %v1272
    %v1274 = vrot.slane %v1205, %v1273
    %v1275 = vmul.f32 %v1011, %v1274
    %v1276 = vmul.f32 %v1012, %v1274
    %v1277 = vmul.f32 %v1013, %v1274
    %v1278 = vmul.f32 %v1014, %v1274
    %v1279 = vlaneseq
    %v1280 = vshrl.u32 %v1279, 7
    %v1281 = vsub.s32 0, %v1280
    %v1282 = vrot.slane %v1270, %v1281
    %v1283 = vadd.f32 %v1275, %v1282
    %v1284 = vadd.f32 %v1276, %v1282
    %v1285 = vadd.f32 %v1277, %v1282
    %v1286 = vadd.f32 %v1278, %v1282
    %v1287 = vld [vmem:[%s0] sm:$0xff]
    %v1288 = vld [vmem:[%s0 + $0x8] sm:$0xff]
    %v1289 = vld [vmem:[%s0 + $0x10] sm:$0xff]
    %v1290 = vld [vmem:[%s0 + $0x18] sm:$0xff]
    %v1291 = vadd.f32 %v1283, %v1287
    %v1292 = vadd.f32 %v1284, %v1288
    %v1293 = vadd.f32 %v1285, %v1289
    %v1294 = vadd.f32 %v1286, %v1290
    %v1295 = vmax.f32 %v1291, 0.0
    %v1296 = vmax.f32 %v1292, 0.0
    %v1297 = vmax.f32 %v1293, 0.0
    %v1298 = vmax.f32 %v1294, 0.0
    %1299 = vst.msk [vmem:[#allocation4] sm:$0xff] %vm402, %v1295
    %1300 = vst.msk [vmem:[#allocation4 + $0x8] sm:$0xff] %vm402, %v1296
    %1301 = vst.msk [vmem:[#allocation4 + $0x10] sm:$0xff] %vm402, %v1297
    %1302 = vst.msk [vmem:[#allocation4 + $0x18] sm:$0xff] %vm402, %v1298
    // Predicated region
    $region30: #{tpu_custom_call.1} parent=1 // pred_check
      _
    $region31: #{tpu_custom_call.1} parent=1 // pred_check_branch
      %1304 = sbr.rel (0) target = $region33
    $region32: #{tpu_custom_call.1} parent=1 // pred_region
      %s1306 = ssub.s32 512, 512
      %1307 = vsyncadd [#allocation5], %s1306
      %s1308 = sshll.u32 [#allocation4], 4
      %s1309 = int_to_ptr.vmem [resolvable:$true] %s1308
      %1314 = dma.vmem_to_hbm [thread:$0]  %s1309, 512, %s7, [#allocation5], 128, 128, 8
    $region33: #{tpu_custom_call.1} parent=1 // pred_fallthru
      _
    // Predicated region
    $region34: #{tpu_custom_call.1} parent=1 // pred_check
      _
    $region35: #{tpu_custom_call.1} parent=1 // pred_check_branch
      %1316 = sbr.rel (0) target = $region37
    $region36: #{tpu_custom_call.1} parent=1 // pred_region
      %1317 = dma.done [#allocation5], 512
    $region37: #{tpu_custom_call.1} parent=1 // pred_fallthru
      _
    %1318 = vsyncpa [#allocation5], 1

</llo_original>
